<compile_context>
chip_gen: v7x
topology: tpu7x:2x2x1
jax: 0.10.0
libtpu: 0.0.40
codegen_flags: <defaults>
</compile_context>

<pallas_src>
from functools import partial

import jax
import jax.numpy as jnp
from jax import lax
from jax.experimental import pallas as pl
from jax.experimental.pallas import tpu as pltpu

# -------------------- small, module-consistent sizes --------------------
B, N, M = 2, 8, 8            # batch, query length, context length
DIM = 32                     # model dim
HEADS = 2                    # heads (default is 8; kept small)
DIM_HEAD = 64                # DEFAULT_DIM_HEAD
INNER = HEADS * DIM_HEAD     # q/k/v projection width == 128
HP = 128                     # per-head width padded up to one lane tile
SCALE = DIM_HEAD ** -0.5     # self.scale


def _attn_kernel(x_ref, ctx_ref, wq_ref, wkv_ref, wo_ref, *out_refs,
                 block_b, emit_intermediates):
    """block_b batch elements, all heads: projections + attention + out proj."""
    if emit_intermediates:
        out_ref, pre_ref, post_ref = out_refs
    else:
        (out_ref,) = out_refs

    # weight loads hoisted out of the batch loop (values reused per batch)
    wq = wq_ref[...]                                   # (DIM, HEADS*HP)
    wkv = wkv_ref[...]                                 # (DIM, 2*HEADS*HP)
    wo_heads = [wo_ref[h] for h in range(HEADS)]       # each (HP, DIM)

    for b in range(block_b):                           # static unroll (tiny)
        x = x_ref[b]                                   # (N, DIM)
        ctx = ctx_ref[b]                               # (M, DIM)

        # all-head projections: one matmul for Q, one fused matmul for K||V
        q = jnp.dot(x, wq, preferred_element_type=jnp.float32)      # (N, H*HP)
        kv = jnp.dot(ctx, wkv, preferred_element_type=jnp.float32)  # (M, 2*H*HP)

        out_acc = jnp.zeros((N, DIM), jnp.float32)
        for h in range(HEADS):                         # static unroll (tiny)
            lo = h * HP                                # 128-lane aligned slices
            q_h = q[:, lo:lo + HP]                     # (N, HP), lanes >=64 are 0
            k_h = kv[:, lo:lo + HP]                    # (M, HP)
            v_h = kv[:, HEADS * HP + lo:HEADS * HP + lo + HP]        # (M, HP)

            # q_h @ k_h^T without an explicit transpose; padded lanes add zeros
            dots = lax.dot_general(
                q_h, k_h, (((1,), (1,)), ((), ())),
                preferred_element_type=jnp.float32) * SCALE          # (N, M)

            # stable_softmax -- exact divide (review correctness concern #1);
            # pl.reciprocal(approx=True) is available if tolerances allow.
            mx = jnp.max(dots, axis=-1, keepdims=True)
            e = jnp.exp(dots - mx)
            attn = e / jnp.sum(e, axis=-1, keepdims=True)

            if emit_intermediates:
                pre_ref[b, h] = dots
                post_ref[b, h] = attn

            # fold the per-head output projection in directly -> no lane concat
            o_h = jnp.dot(attn, v_h, preferred_element_type=jnp.float32)    # (N, HP)
            out_acc = out_acc + jnp.dot(o_h, wo_heads[h],
                                        preferred_element_type=jnp.float32)  # (N, DIM)

        out_ref[b] = out_acc


def prepare_params(params):
    """One-time (call OUTSIDE jit) repack of PyTorch nn.Linear weights into the
    lane-tile-aligned kernel layout.  Only the l==1 weights are observable."""
    wq_t = params["wq2"].T                             # (DIM, INNER)
    wk_t = params["wk2"].T
    wv_t = params["wv2"].T
    wo_t = params["wo2"].T                             # (INNER, DIM)

    def pad_head_cols(w_t):
        # (DIM, HEADS*DIM_HEAD) -> per-head columns padded to HP=128 lanes
        w3 = w_t.reshape(DIM, HEADS, DIM_HEAD)
        w3 = jnp.pad(w3, ((0, 0), (0, 0), (0, HP - DIM_HEAD)))
        return w3.reshape(DIM, HEADS * HP)

    wq_p = pad_head_cols(wq_t)                                        # (DIM, 256)
    wkv_p = jnp.concatenate([pad_head_cols(wk_t), pad_head_cols(wv_t)], axis=1)  # (DIM, 512)

    wo3 = wo_t.reshape(HEADS, DIM_HEAD, DIM)
    wo_p = jnp.pad(wo3, ((0, 0), (0, HP - DIM_HEAD), (0, 0)))         # (HEADS, HP, DIM)
    return {"wq_p": wq_p, "wkv_p": wkv_p, "wo_p": wo_p}


def _pick_block_batch():
    """v7x has 2 TensorCores/chip: keep grid=(B,) parallel (one batch per core).
    Single-TC chips (v5e/v6e) or unknown: fold the whole batch into one grid
    step (grid=(1,)) to avoid per-step overhead and duplicate weight DMAs."""
    try:
        kind = jax.devices()[0].device_kind.lower()
    except Exception:
        kind = ""
    return 1 if "v7" in kind else B


def double_attention_forward(x, context, kparams, *, block_b=B,
                             with_intermediates=True):
    """Mirrors DoubleAttention.forward.  The reference loop overwrites the l==0
    result, so only the l==1 layer is computed (identical observable output)."""
    ctx = context[1]
    assert B % block_b == 0
    grid = (B // block_b,)

    out_shapes = [jax.ShapeDtypeStruct((B, N, DIM), jnp.float32)]
    out_specs = [pl.BlockSpec((block_b, N, DIM), lambda b: (b, 0, 0))]
    if with_intermediates:
        out_shapes += [jax.ShapeDtypeStruct((B, HEADS, N, M), jnp.float32)] * 2
        out_specs += [pl.BlockSpec((block_b, HEADS, N, M),
                                   lambda b: (b, 0, 0, 0))] * 2

    kernel = partial(_attn_kernel, block_b=block_b,
                     emit_intermediates=with_intermediates)

    results = pl.pallas_call(
        kernel,
        out_shape=tuple(out_shapes),
        grid_spec=pltpu.PrefetchScalarGridSpec(
            num_scalar_prefetch=0,
            grid=grid,
            in_specs=[
                pl.BlockSpec((block_b, N, DIM), lambda b: (b, 0, 0)),        # x
                pl.BlockSpec((block_b, M, DIM), lambda b: (b, 0, 0)),        # context[1]
                pl.BlockSpec((DIM, HEADS * HP), lambda b: (0, 0)),           # Wq (padded heads)
                pl.BlockSpec((DIM, 2 * HEADS * HP), lambda b: (0, 0)),       # Wk||Wv fused
                pl.BlockSpec((HEADS, HP, DIM), lambda b: (0, 0, 0)),         # Wo per head
            ],
            out_specs=out_specs,
        ),
        compiler_params=pltpu.CompilerParams(
            dimension_semantics=("parallel",),   # v7x: one batch per TensorCore
        ),
    )(x, ctx, kparams["wq_p"], kparams["wkv_p"], kparams["wo_p"])

    if with_intermediates:
        out, pre, post = results
        return out, (pre, post)
    (out,) = results
    return out, None


def _ref_layer(x, ctx, w_q, w_k, w_v, w_out):
    """Pure-JAX reference for the l==1 layer (matches the PyTorch math)."""
    q = x @ w_q.T
    k = ctx @ w_k.T
    v = ctx @ w_v.T
    q = q.reshape(B, N, HEADS, DIM_HEAD).transpose(0, 2, 1, 3)
    k = k.reshape(B, M, HEADS, DIM_HEAD).transpose(0, 2, 1, 3)
    v = v.reshape(B, M, HEADS, DIM_HEAD).transpose(0, 2, 1, 3)
    dots = jnp.einsum("bhid,bhjd->bhij", q, k) * SCALE
    attn = jax.nn.softmax(dots, axis=-1)
    o = jnp.einsum("bhij,bhjd->bhid", attn, v)
    o = o.transpose(0, 2, 1, 3).reshape(B, N, INNER)
    return o @ w_out.T, dots, attn


if __name__ == "__main__":
    key = jax.random.PRNGKey(0)
    keys = jax.random.split(key, 11)

    x = jax.random.normal(keys[0], (B, N, DIM), dtype=jnp.float32)
    context = [
        jax.random.normal(keys[1], (B, M, DIM), dtype=jnp.float32),
        jax.random.normal(keys[2], (B, M, DIM), dtype=jnp.float32),
    ]

    def init_w(k, shape):
        return jax.random.normal(k, shape, dtype=jnp.float32) * 0.02

    # PyTorch nn.Linear weight layout: (out_features, in_features)
    params = {
        "wq1": init_w(keys[3], (INNER, DIM)),
        "wk1": init_w(keys[4], (INNER, DIM)),
        "wv1": init_w(keys[5], (INNER, DIM)),
        "wo1": init_w(keys[6], (DIM, INNER)),
        "wq2": init_w(keys[7], (INNER, DIM)),
        "wk2": init_w(keys[8], (INNER, DIM)),
        "wv2": init_w(keys[9], (INNER, DIM)),
        "wo2": init_w(keys[10], (DIM, INNER)),
    }

    # one-time weight repack OUTSIDE jit (no per-call transpose/pad HLOs)
    kparams = prepare_params(params)
    bb = _pick_block_batch()

    fwd = jax.jit(partial(double_attention_forward, block_b=bb,
                          with_intermediates=True))
    out, (pre_attn, post_attn) = fwd(x, context, kparams)
    jax.block_until_ready(out)
    jax.block_until_ready(pre_attn)
    jax.block_until_ready(post_attn)

    # correctness check against a pure-JAX reference of the returned (l==1) layer
    out_ref, pre_ref, post_ref = _ref_layer(
        x, context[1], params["wq2"], params["wk2"], params["wv2"], params["wo2"]
    )
    assert jnp.allclose(pre_attn, pre_ref, rtol=1e-4, atol=1e-5)
    assert jnp.allclose(post_attn, post_ref, rtol=1e-4, atol=1e-5)
    assert jnp.allclose(out, out_ref, rtol=1e-4, atol=1e-5)

    print("KERNEL_OK")
</pallas_src>

<mosaic_0001>
module attributes {stable_mosaic.version = 11 : i64} {
  func.func @_attn_kernel(%arg0: i32, %arg1: memref<2x8x32xf32, #tpu.memory_space<vmem>>, %arg2: memref<2x8x32xf32, #tpu.memory_space<vmem>>, %arg3: memref<32x256xf32, #tpu.memory_space<vmem>>, %arg4: memref<32x512xf32, #tpu.memory_space<vmem>>, %arg5: memref<2x128x32xf32, #tpu.memory_space<vmem>>, %arg6: memref<2x8x32xf32, #tpu.memory_space<vmem>>, %arg7: memref<2x2x8x8xf32, #tpu.memory_space<vmem>>, %arg8: memref<2x2x8x8xf32, #tpu.memory_space<vmem>>) attributes {dimension_semantics = [#tpu.dimension_semantics<parallel>], iteration_bounds = array<i64: 1>, scalar_prefetch = 0 : i64, scratch_operands = 0 : i64, tpu.core_type = #tpu.core_type<tc>, window_params = [{transform_indices = @transform_0, window_bounds = array<i64: 2, 8, 32>}, {transform_indices = @transform_1, window_bounds = array<i64: 2, 8, 32>}, {pipeline_mode = #tpu.pipeline_mode<synchronous>, transform_indices = @transform_2, window_bounds = array<i64: 32, 256>}, {pipeline_mode = #tpu.pipeline_mode<synchronous>, transform_indices = @transform_3, window_bounds = array<i64: 32, 512>}, {pipeline_mode = #tpu.pipeline_mode<synchronous>, transform_indices = @transform_4, window_bounds = array<i64: 2, 128, 32>}, {transform_indices = @transform_5, window_bounds = array<i64: 2, 8, 32>}, {transform_indices = @transform_6, window_bounds = array<i64: 2, 2, 8, 8>}, {transform_indices = @transform_7, window_bounds = array<i64: 2, 2, 8, 8>}]} {
    %c0 = arith.constant 0 : index
    %c0_0 = arith.constant 0 : index
    %0 = vector.load %arg3[%c0, %c0_0] : memref<32x256xf32, #tpu.memory_space<vmem>>, vector<32x256xf32>
    %c0_1 = arith.constant 0 : index
    %c0_2 = arith.constant 0 : index
    %1 = vector.load %arg4[%c0_1, %c0_2] : memref<32x512xf32, #tpu.memory_space<vmem>>, vector<32x512xf32>
    %c0_3 = arith.constant 0 : index
    %c0_4 = arith.constant 0 : index
    %c0_5 = arith.constant 0 : index
    %2 = vector.load %arg5[%c0_3, %c0_4, %c0_5] : memref<2x128x32xf32, #tpu.memory_space<vmem>>, vector<1x128x32xf32>
    %3 = vector.shape_cast %2 : vector<1x128x32xf32> to vector<128x32xf32>
    %c1 = arith.constant 1 : index
    %c0_6 = arith.constant 0 : index
    %c0_7 = arith.constant 0 : index
    %4 = vector.load %arg5[%c1, %c0_6, %c0_7] : memref<2x128x32xf32, #tpu.memory_space<vmem>>, vector<1x128x32xf32>
    %5 = vector.shape_cast %4 : vector<1x128x32xf32> to vector<128x32xf32>
    %c0_8 = arith.constant 0 : index
    %c0_9 = arith.constant 0 : index
    %c0_10 = arith.constant 0 : index
    %6 = vector.load %arg1[%c0_8, %c0_9, %c0_10] : memref<2x8x32xf32, #tpu.memory_space<vmem>>, vector<1x8x32xf32>
    %7 = vector.shape_cast %6 : vector<1x8x32xf32> to vector<8x32xf32>
    %c0_11 = arith.constant 0 : index
    %c0_12 = arith.constant 0 : index
    %c0_13 = arith.constant 0 : index
    %8 = vector.load %arg2[%c0_11, %c0_12, %c0_13] : memref<2x8x32xf32, #tpu.memory_space<vmem>>, vector<1x8x32xf32>
    %9 = vector.shape_cast %8 : vector<1x8x32xf32> to vector<8x32xf32>
    %cst = arith.constant dense<0.000000e+00> : vector<8x256xf32>
    %10 = tpu.matmul %7, %0, %cst {dimension_numbers = #tpu.dot_dimension_numbers<[1], [0], [0], [1], [0, 0, 1, 1], [], []>} : vector<8x32xf32>, vector<32x256xf32>, vector<8x256xf32> -> vector<8x256xf32>
    %cst_14 = arith.constant dense<0.000000e+00> : vector<8x512xf32>
    %11 = tpu.matmul %9, %1, %cst_14 {dimension_numbers = #tpu.dot_dimension_numbers<[1], [0], [0], [1], [0, 0, 1, 1], [], []>} : vector<8x32xf32>, vector<32x512xf32>, vector<8x512xf32> -> vector<8x512xf32>
    %cst_15 = arith.constant 0.000000e+00 : f32
    %12 = vector.broadcast %cst_15 : f32 to vector<8x32xf32>
    %13 = vector.extract_strided_slice %10 {offsets = [0, 0], sizes = [8, 128], strides = [1, 1]} : vector<8x256xf32> to vector<8x128xf32>
    %14 = vector.extract_strided_slice %11 {offsets = [0, 0], sizes = [8, 128], strides = [1, 1]} : vector<8x512xf32> to vector<8x128xf32>
    %15 = vector.extract_strided_slice %11 {offsets = [0, 256], sizes = [8, 128], strides = [1, 1]} : vector<8x512xf32> to vector<8x128xf32>
    %cst_16 = arith.constant dense<0.000000e+00> : vector<8x8xf32>
    %16 = tpu.matmul %13, %14, %cst_16 {dimension_numbers = #tpu.dot_dimension_numbers<[1], [1], [0], [0], [0, 0, 1, 0], [], []>} : vector<8x128xf32>, vector<8x128xf32>, vector<8x8xf32> -> vector<8x8xf32>
    %cst_17 = arith.constant 1.250000e-01 : f32
    %17 = vector.broadcast %cst_17 : f32 to vector<8x8xf32>
    %18 = arith.mulf %16, %17 : vector<8x8xf32>
    %cst_18 = arith.constant dense<0xFF800000> : vector<8xf32>
    %19 = vector.multi_reduction <maximumf>, %18, %cst_18 [1] : vector<8x8xf32> to vector<8xf32>
    %20 = vector.shape_cast %19 : vector<8xf32> to vector<8x1xf32>
    %21 = vector.broadcast %20 : vector<8x1xf32> to vector<8x8xf32>
    %22 = arith.subf %18, %21 : vector<8x8xf32>
    %23 = math.exp %22 : vector<8x8xf32>
    %cst_19 = arith.constant dense<0.000000e+00> : vector<8xf32>
    %24 = vector.multi_reduction <add>, %23, %cst_19 [1] : vector<8x8xf32> to vector<8xf32>
    %25 = vector.shape_cast %24 : vector<8xf32> to vector<8x1xf32>
    %26 = vector.broadcast %25 : vector<8x1xf32> to vector<8x8xf32>
    %27 = arith.divf %23, %26 : vector<8x8xf32>
    %c0_20 = arith.constant 0 : index
    %c0_21 = arith.constant 0 : index
    %c0_22 = arith.constant 0 : index
    %c0_23 = arith.constant 0 : index
    %28 = vector.load %arg7[%c0_20, %c0_21, %c0_22, %c0_23] : memref<2x2x8x8xf32, #tpu.memory_space<vmem>>, vector<1x1x8x8xf32>
    %29 = vector.shape_cast %28 : vector<1x1x8x8xf32> to vector<8x8xf32>
    %30 = vector.shape_cast %18 : vector<8x8xf32> to vector<1x1x8x8xf32>
    tpu.vector_store %arg7[%c0_20, %c0_21, %c0_22, %c0_23], %30 {strides = array<i32>} : memref<2x2x8x8xf32, #tpu.memory_space<vmem>>, vector<1x1x8x8xf32>,
    %c0_24 = arith.constant 0 : index
    %c0_25 = arith.constant 0 : index
    %c0_26 = arith.constant 0 : index
    %c0_27 = arith.constant 0 : index
    %31 = vector.load %arg8[%c0_24, %c0_25, %c0_26, %c0_27] : memref<2x2x8x8xf32, #tpu.memory_space<vmem>>, vector<1x1x8x8xf32>
    %32 = vector.shape_cast %31 : vector<1x1x8x8xf32> to vector<8x8xf32>
    %33 = vector.shape_cast %27 : vector<8x8xf32> to vector<1x1x8x8xf32>
    tpu.vector_store %arg8[%c0_24, %c0_25, %c0_26, %c0_27], %33 {strides = array<i32>} : memref<2x2x8x8xf32, #tpu.memory_space<vmem>>, vector<1x1x8x8xf32>,
    %cst_28 = arith.constant dense<0.000000e+00> : vector<8x128xf32>
    %34 = tpu.matmul %27, %15, %cst_28 {dimension_numbers = #tpu.dot_dimension_numbers<[1], [0], [0], [1], [0, 0, 1, 1], [], []>} : vector<8x8xf32>, vector<8x128xf32>, vector<8x128xf32> -> vector<8x128xf32>
    %cst_29 = arith.constant dense<0.000000e+00> : vector<8x32xf32>
    %35 = tpu.matmul %34, %3, %cst_29 {dimension_numbers = #tpu.dot_dimension_numbers<[1], [0], [0], [1], [0, 0, 1, 1], [], []>} : vector<8x128xf32>, vector<128x32xf32>, vector<8x32xf32> -> vector<8x32xf32>
    %36 = arith.addf %12, %35 : vector<8x32xf32>
    %37 = vector.extract_strided_slice %10 {offsets = [0, 128], sizes = [8, 128], strides = [1, 1]} : vector<8x256xf32> to vector<8x128xf32>
    %38 = vector.extract_strided_slice %11 {offsets = [0, 128], sizes = [8, 128], strides = [1, 1]} : vector<8x512xf32> to vector<8x128xf32>
    %39 = vector.extract_strided_slice %11 {offsets = [0, 384], sizes = [8, 128], strides = [1, 1]} : vector<8x512xf32> to vector<8x128xf32>
    %cst_30 = arith.constant dense<0.000000e+00> : vector<8x8xf32>
    %40 = tpu.matmul %37, %38, %cst_30 {dimension_numbers = #tpu.dot_dimension_numbers<[1], [1], [0], [0], [0, 0, 1, 0], [], []>} : vector<8x128xf32>, vector<8x128xf32>, vector<8x8xf32> -> vector<8x8xf32>
    %cst_31 = arith.constant 1.250000e-01 : f32
    %41 = vector.broadcast %cst_31 : f32 to vector<8x8xf32>
    %42 = arith.mulf %40, %41 : vector<8x8xf32>
    %cst_32 = arith.constant dense<0xFF800000> : vector<8xf32>
    %43 = vector.multi_reduction <maximumf>, %42, %cst_32 [1] : vector<8x8xf32> to vector<8xf32>
    %44 = vector.shape_cast %43 : vector<8xf32> to vector<8x1xf32>
    %45 = vector.broadcast %44 : vector<8x1xf32> to vector<8x8xf32>
    %46 = arith.subf %42, %45 : vector<8x8xf32>
    %47 = math.exp %46 : vector<8x8xf32>
    %cst_33 = arith.constant dense<0.000000e+00> : vector<8xf32>
    %48 = vector.multi_reduction <add>, %47, %cst_33 [1] : vector<8x8xf32> to vector<8xf32>
    %49 = vector.shape_cast %48 : vector<8xf32> to vector<8x1xf32>
    %50 = vector.broadcast %49 : vector<8x1xf32> to vector<8x8xf32>
    %51 = arith.divf %47, %50 : vector<8x8xf32>
    %c0_34 = arith.constant 0 : index
    %c1_35 = arith.constant 1 : index
    %c0_36 = arith.constant 0 : index
    %c0_37 = arith.constant 0 : index
    %52 = vector.load %arg7[%c0_34, %c1_35, %c0_36, %c0_37] : memref<2x2x8x8xf32, #tpu.memory_space<vmem>>, vector<1x1x8x8xf32>
    %53 = vector.shape_cast %52 : vector<1x1x8x8xf32> to vector<8x8xf32>
    %54 = vector.shape_cast %42 : vector<8x8xf32> to vector<1x1x8x8xf32>
    tpu.vector_store %arg7[%c0_34, %c1_35, %c0_36, %c0_37], %54 {strides = array<i32>} : memref<2x2x8x8xf32, #tpu.memory_space<vmem>>, vector<1x1x8x8xf32>,
    %c0_38 = arith.constant 0 : index
    %c1_39 = arith.constant 1 : index
    %c0_40 = arith.constant 0 : index
    %c0_41 = arith.constant 0 : index
    %55 = vector.load %arg8[%c0_38, %c1_39, %c0_40, %c0_41] : memref<2x2x8x8xf32, #tpu.memory_space<vmem>>, vector<1x1x8x8xf32>
    %56 = vector.shape_cast %55 : vector<1x1x8x8xf32> to vector<8x8xf32>
    %57 = vector.shape_cast %51 : vector<8x8xf32> to vector<1x1x8x8xf32>
    tpu.vector_store %arg8[%c0_38, %c1_39, %c0_40, %c0_41], %57 {strides = array<i32>} : memref<2x2x8x8xf32, #tpu.memory_space<vmem>>, vector<1x1x8x8xf32>,
    %cst_42 = arith.constant dense<0.000000e+00> : vector<8x128xf32>
    %58 = tpu.matmul %51, %39, %cst_42 {dimension_numbers = #tpu.dot_dimension_numbers<[1], [0], [0], [1], [0, 0, 1, 1], [], []>} : vector<8x8xf32>, vector<8x128xf32>, vector<8x128xf32> -> vector<8x128xf32>
    %cst_43 = arith.constant dense<0.000000e+00> : vector<8x32xf32>
    %59 = tpu.matmul %58, %5, %cst_43 {dimension_numbers = #tpu.dot_dimension_numbers<[1], [0], [0], [1], [0, 0, 1, 1], [], []>} : vector<8x128xf32>, vector<128x32xf32>, vector<8x32xf32> -> vector<8x32xf32>
    %60 = arith.addf %36, %59 : vector<8x32xf32>
    %c0_44 = arith.constant 0 : index
    %c0_45 = arith.constant 0 : index
    %c0_46 = arith.constant 0 : index
    %61 = vector.load %arg6[%c0_44, %c0_45, %c0_46] : memref<2x8x32xf32, #tpu.memory_space<vmem>>, vector<1x8x32xf32>
    %62 = vector.shape_cast %61 : vector<1x8x32xf32> to vector<8x32xf32>
    %63 = vector.shape_cast %60 : vector<8x32xf32> to vector<1x8x32xf32>
    tpu.vector_store %arg6[%c0_44, %c0_45, %c0_46], %63 {strides = array<i32>} : memref<2x8x32xf32, #tpu.memory_space<vmem>>, vector<1x8x32xf32>,
    %c1_47 = arith.constant 1 : index
    %c0_48 = arith.constant 0 : index
    %c0_49 = arith.constant 0 : index
    %64 = vector.load %arg1[%c1_47, %c0_48, %c0_49] : memref<2x8x32xf32, #tpu.memory_space<vmem>>, vector<1x8x32xf32>
    %65 = vector.shape_cast %64 : vector<1x8x32xf32> to vector<8x32xf32>
    %c1_50 = arith.constant 1 : index
    %c0_51 = arith.constant 0 : index
    %c0_52 = arith.constant 0 : index
    %66 = vector.load %arg2[%c1_50, %c0_51, %c0_52] : memref<2x8x32xf32, #tpu.memory_space<vmem>>, vector<1x8x32xf32>
    %67 = vector.shape_cast %66 : vector<1x8x32xf32> to vector<8x32xf32>
    %cst_53 = arith.constant dense<0.000000e+00> : vector<8x256xf32>
    %68 = tpu.matmul %65, %0, %cst_53 {dimension_numbers = #tpu.dot_dimension_numbers<[1], [0], [0], [1], [0, 0, 1, 1], [], []>} : vector<8x32xf32>, vector<32x256xf32>, vector<8x256xf32> -> vector<8x256xf32>
    %cst_54 = arith.constant dense<0.000000e+00> : vector<8x512xf32>
    %69 = tpu.matmul %67, %1, %cst_54 {dimension_numbers = #tpu.dot_dimension_numbers<[1], [0], [0], [1], [0, 0, 1, 1], [], []>} : vector<8x32xf32>, vector<32x512xf32>, vector<8x512xf32> -> vector<8x512xf32>
    %cst_55 = arith.constant 0.000000e+00 : f32
    %70 = vector.broadcast %cst_55 : f32 to vector<8x32xf32>
    %71 = vector.extract_strided_slice %68 {offsets = [0, 0], sizes = [8, 128], strides = [1, 1]} : vector<8x256xf32> to vector<8x128xf32>
    %72 = vector.extract_strided_slice %69 {offsets = [0, 0], sizes = [8, 128], strides = [1, 1]} : vector<8x512xf32> to vector<8x128xf32>
    %73 = vector.extract_strided_slice %69 {offsets = [0, 256], sizes = [8, 128], strides = [1, 1]} : vector<8x512xf32> to vector<8x128xf32>
    %cst_56 = arith.constant dense<0.000000e+00> : vector<8x8xf32>
    %74 = tpu.matmul %71, %72, %cst_56 {dimension_numbers = #tpu.dot_dimension_numbers<[1], [1], [0], [0], [0, 0, 1, 0], [], []>} : vector<8x128xf32>, vector<8x128xf32>, vector<8x8xf32> -> vector<8x8xf32>
    %cst_57 = arith.constant 1.250000e-01 : f32
    %75 = vector.broadcast %cst_57 : f32 to vector<8x8xf32>
    %76 = arith.mulf %74, %75 : vector<8x8xf32>
    %cst_58 = arith.constant dense<0xFF800000> : vector<8xf32>
    %77 = vector.multi_reduction <maximumf>, %76, %cst_58 [1] : vector<8x8xf32> to vector<8xf32>
    %78 = vector.shape_cast %77 : vector<8xf32> to vector<8x1xf32>
    %79 = vector.broadcast %78 : vector<8x1xf32> to vector<8x8xf32>
    %80 = arith.subf %76, %79 : vector<8x8xf32>
    %81 = math.exp %80 : vector<8x8xf32>
    %cst_59 = arith.constant dense<0.000000e+00> : vector<8xf32>
    %82 = vector.multi_reduction <add>, %81, %cst_59 [1] : vector<8x8xf32> to vector<8xf32>
    %83 = vector.shape_cast %82 : vector<8xf32> to vector<8x1xf32>
    %84 = vector.broadcast %83 : vector<8x1xf32> to vector<8x8xf32>
    %85 = arith.divf %81, %84 : vector<8x8xf32>
    %c1_60 = arith.constant 1 : index
    %c0_61 = arith.constant 0 : index
    %c0_62 = arith.constant 0 : index
    %c0_63 = arith.constant 0 : index
    %86 = vector.load %arg7[%c1_60, %c0_61, %c0_62, %c0_63] : memref<2x2x8x8xf32, #tpu.memory_space<vmem>>, vector<1x1x8x8xf32>
    %87 = vector.shape_cast %86 : vector<1x1x8x8xf32> to vector<8x8xf32>
    %88 = vector.shape_cast %76 : vector<8x8xf32> to vector<1x1x8x8xf32>
    tpu.vector_store %arg7[%c1_60, %c0_61, %c0_62, %c0_63], %88 {strides = array<i32>} : memref<2x2x8x8xf32, #tpu.memory_space<vmem>>, vector<1x1x8x8xf32>,
    %c1_64 = arith.constant 1 : index
    %c0_65 = arith.constant 0 : index
    %c0_66 = arith.constant 0 : index
    %c0_67 = arith.constant 0 : index
    %89 = vector.load %arg8[%c1_64, %c0_65, %c0_66, %c0_67] : memref<2x2x8x8xf32, #tpu.memory_space<vmem>>, vector<1x1x8x8xf32>
    %90 = vector.shape_cast %89 : vector<1x1x8x8xf32> to vector<8x8xf32>
    %91 = vector.shape_cast %85 : vector<8x8xf32> to vector<1x1x8x8xf32>
    tpu.vector_store %arg8[%c1_64, %c0_65, %c0_66, %c0_67], %91 {strides = array<i32>} : memref<2x2x8x8xf32, #tpu.memory_space<vmem>>, vector<1x1x8x8xf32>,
    %cst_68 = arith.constant dense<0.000000e+00> : vector<8x128xf32>
    %92 = tpu.matmul %85, %73, %cst_68 {dimension_numbers = #tpu.dot_dimension_numbers<[1], [0], [0], [1], [0, 0, 1, 1], [], []>} : vector<8x8xf32>, vector<8x128xf32>, vector<8x128xf32> -> vector<8x128xf32>
    %cst_69 = arith.constant dense<0.000000e+00> : vector<8x32xf32>
    %93 = tpu.matmul %92, %3, %cst_69 {dimension_numbers = #tpu.dot_dimension_numbers<[1], [0], [0], [1], [0, 0, 1, 1], [], []>} : vector<8x128xf32>, vector<128x32xf32>, vector<8x32xf32> -> vector<8x32xf32>
    %94 = arith.addf %70, %93 : vector<8x32xf32>
    %95 = vector.extract_strided_slice %68 {offsets = [0, 128], sizes = [8, 128], strides = [1, 1]} : vector<8x256xf32> to vector<8x128xf32>
    %96 = vector.extract_strided_slice %69 {offsets = [0, 128], sizes = [8, 128], strides = [1, 1]} : vector<8x512xf32> to vector<8x128xf32>
    %97 = vector.extract_strided_slice %69 {offsets = [0, 384], sizes = [8, 128], strides = [1, 1]} : vector<8x512xf32> to vector<8x128xf32>
    %cst_70 = arith.constant dense<0.000000e+00> : vector<8x8xf32>
    %98 = tpu.matmul %95, %96, %cst_70 {dimension_numbers = #tpu.dot_dimension_numbers<[1], [1], [0], [0], [0, 0, 1, 0], [], []>} : vector<8x128xf32>, vector<8x128xf32>, vector<8x8xf32> -> vector<8x8xf32>
    %cst_71 = arith.constant 1.250000e-01 : f32
    %99 = vector.broadcast %cst_71 : f32 to vector<8x8xf32>
    %100 = arith.mulf %98, %99 : vector<8x8xf32>
    %cst_72 = arith.constant dense<0xFF800000> : vector<8xf32>
    %101 = vector.multi_reduction <maximumf>, %100, %cst_72 [1] : vector<8x8xf32> to vector<8xf32>
    %102 = vector.shape_cast %101 : vector<8xf32> to vector<8x1xf32>
    %103 = vector.broadcast %102 : vector<8x1xf32> to vector<8x8xf32>
    %104 = arith.subf %100, %103 : vector<8x8xf32>
    %105 = math.exp %104 : vector<8x8xf32>
    %cst_73 = arith.constant dense<0.000000e+00> : vector<8xf32>
    %106 = vector.multi_reduction <add>, %105, %cst_73 [1] : vector<8x8xf32> to vector<8xf32>
    %107 = vector.shape_cast %106 : vector<8xf32> to vector<8x1xf32>
    %108 = vector.broadcast %107 : vector<8x1xf32> to vector<8x8xf32>
    %109 = arith.divf %105, %108 : vector<8x8xf32>
    %c1_74 = arith.constant 1 : index
    %c1_75 = arith.constant 1 : index
    %c0_76 = arith.constant 0 : index
    %c0_77 = arith.constant 0 : index
    %110 = vector.load %arg7[%c1_74, %c1_75, %c0_76, %c0_77] : memref<2x2x8x8xf32, #tpu.memory_space<vmem>>, vector<1x1x8x8xf32>
    %111 = vector.shape_cast %110 : vector<1x1x8x8xf32> to vector<8x8xf32>
    %112 = vector.shape_cast %100 : vector<8x8xf32> to vector<1x1x8x8xf32>
    tpu.vector_store %arg7[%c1_74, %c1_75, %c0_76, %c0_77], %112 {strides = array<i32>} : memref<2x2x8x8xf32, #tpu.memory_space<vmem>>, vector<1x1x8x8xf32>,
    %c1_78 = arith.constant 1 : index
    %c1_79 = arith.constant 1 : index
    %c0_80 = arith.constant 0 : index
    %c0_81 = arith.constant 0 : index
    %113 = vector.load %arg8[%c1_78, %c1_79, %c0_80, %c0_81] : memref<2x2x8x8xf32, #tpu.memory_space<vmem>>, vector<1x1x8x8xf32>
    %114 = vector.shape_cast %113 : vector<1x1x8x8xf32> to vector<8x8xf32>
    %115 = vector.shape_cast %109 : vector<8x8xf32> to vector<1x1x8x8xf32>
    tpu.vector_store %arg8[%c1_78, %c1_79, %c0_80, %c0_81], %115 {strides = array<i32>} : memref<2x2x8x8xf32, #tpu.memory_space<vmem>>, vector<1x1x8x8xf32>,
    %cst_82 = arith.constant dense<0.000000e+00> : vector<8x128xf32>
    %116 = tpu.matmul %109, %97, %cst_82 {dimension_numbers = #tpu.dot_dimension_numbers<[1], [0], [0], [1], [0, 0, 1, 1], [], []>} : vector<8x8xf32>, vector<8x128xf32>, vector<8x128xf32> -> vector<8x128xf32>
    %cst_83 = arith.constant dense<0.000000e+00> : vector<8x32xf32>
    %117 = tpu.matmul %116, %5, %cst_83 {dimension_numbers = #tpu.dot_dimension_numbers<[1], [0], [0], [1], [0, 0, 1, 1], [], []>} : vector<8x128xf32>, vector<128x32xf32>, vector<8x32xf32> -> vector<8x32xf32>
    %118 = arith.addf %94, %117 : vector<8x32xf32>
    %c1_84 = arith.constant 1 : index
    %c0_85 = arith.constant 0 : index
    %c0_86 = arith.constant 0 : index
    %119 = vector.load %arg6[%c1_84, %c0_85, %c0_86] : memref<2x8x32xf32, #tpu.memory_space<vmem>>, vector<1x8x32xf32>
    %120 = vector.shape_cast %119 : vector<1x8x32xf32> to vector<8x32xf32>
    %121 = vector.shape_cast %118 : vector<8x32xf32> to vector<1x8x32xf32>
    tpu.vector_store %arg6[%c1_84, %c0_85, %c0_86], %121 {strides = array<i32>} : memref<2x8x32xf32, #tpu.memory_space<vmem>>, vector<1x8x32xf32>,
    return
  }
  func.func @transform_0(%arg0: i32) -> (i32, i32, i32) {
    %c0_i32 = arith.constant 0 : i32
    %c0_i32_0 = arith.constant 0 : i32
    %c0_i32_1 = arith.constant 0 : i32
    return %arg0, %c0_i32, %c0_i32_0 : i32, i32, i32
  }
  func.func @transform_1(%arg0: i32) -> (i32, i32, i32) {
    %c0_i32 = arith.constant 0 : i32
    %c0_i32_0 = arith.constant 0 : i32
    %c0_i32_1 = arith.constant 0 : i32
    return %arg0, %c0_i32, %c0_i32_0 : i32, i32, i32
  }
  func.func @transform_2(%arg0: i32) -> (i32, i32) {
    %c0_i32 = arith.constant 0 : i32
    %c0_i32_0 = arith.constant 0 : i32
    %c0_i32_1 = arith.constant 0 : i32
    return %c0_i32, %c0_i32_0 : i32, i32
  }
  func.func @transform_3(%arg0: i32) -> (i32, i32) {
    %c0_i32 = arith.constant 0 : i32
    %c0_i32_0 = arith.constant 0 : i32
    %c0_i32_1 = arith.constant 0 : i32
    return %c0_i32, %c0_i32_0 : i32, i32
  }
  func.func @transform_4(%arg0: i32) -> (i32, i32, i32) {
    %c0_i32 = arith.constant 0 : i32
    %c0_i32_0 = arith.constant 0 : i32
    %c0_i32_1 = arith.constant 0 : i32
    %c0_i32_2 = arith.constant 0 : i32
    return %c0_i32, %c0_i32_0, %c0_i32_1 : i32, i32, i32
  }
  func.func @transform_5(%arg0: i32) -> (i32, i32, i32) {
    %c0_i32 = arith.constant 0 : i32
    %c0_i32_0 = arith.constant 0 : i32
    %c0_i32_1 = arith.constant 0 : i32
    return %arg0, %c0_i32, %c0_i32_0 : i32, i32, i32
  }
  func.func @transform_6(%arg0: i32) -> (i32, i32, i32, i32) {
    %c0_i32 = arith.constant 0 : i32
    %c0_i32_0 = arith.constant 0 : i32
    %c0_i32_1 = arith.constant 0 : i32
    %c0_i32_2 = arith.constant 0 : i32
    return %arg0, %c0_i32, %c0_i32_0, %c0_i32_1 : i32, i32, i32, i32
  }
  func.func @transform_7(%arg0: i32) -> (i32, i32, i32, i32) {
    %c0_i32 = arith.constant 0 : i32
    %c0_i32_0 = arith.constant 0 : i32
    %c0_i32_1 = arith.constant 0 : i32
    %c0_i32_2 = arith.constant 0 : i32
    return %arg0, %c0_i32, %c0_i32_0, %c0_i32_1 : i32, i32, i32, i32
  }
}

</mosaic_0001>

<llo_original>
// kernel: double_attention_forward.1
$region0: #{double_attention_forward.1}
  #allocation0 [shape = 'u32[]', space=smem, size = 0x4, offset = 0x4, fixed_abs, tag = 'smem constant byte address 0x4 - core index']
  #allocation1 [shape = 'u32[144,128]{1,0:T(1,128)}', space=vmem, size = 0x12000, scoped, tag = 'internal scratch']
  %s0 = inlined_call_operand.vmem [shape: f32[2,8,32], index: 0, kind: input, shape index: {}]
  %s1 = inlined_call_operand.vmem [shape: f32[2,8,32], index: 1, kind: input, shape index: {}]
  %s2 = inlined_call_operand.vmem [shape: f32[32,256], index: 2, kind: input, shape index: {}]
  %s3 = inlined_call_operand.vmem [shape: f32[32,512], index: 3, kind: input, shape index: {}]
  %s4 = inlined_call_operand.vmem [shape: f32[2,128,32], index: 4, kind: input, shape index: {}]
  %s5 = inlined_call_operand.hbm [shape: f32[2,8,32], index: 5, kind: output, shape index: {0}]
  %s6 = inlined_call_operand.hbm [shape: f32[2,2,8,8], index: 6, kind: output, shape index: {1}]
  %s7 = inlined_call_operand.hbm [shape: f32[2,2,8,8], index: 7, kind: output, shape index: {2}]
  %8 = xla_tuple %s5, %s6, %s7
  %s9 = sld [smem:[#allocation0]]
  $region46: #{double_attention_forward.1} parent=0
    _
  %s11 = ssub.s32 1, %s9
  %s12 = scalar_select 0, %s11, %s9
  $region1: #{double_attention_forward.1} parent=0
    #allocation2 [shape = 'u8[8192]{0}', space=vmem, size = 0x2000, scoped, tag = 'output window, operand 0, single buffered']
    #allocation3 [shape = 's32[1]{0}', space=sflag, size = 0x4, scoped, tag = 'scoped memory for double_attention_forward.1']
    #allocation4 [shape = 'u8[16384]{0}', space=vmem, size = 0x4000, scoped, tag = 'output window, operand 1, single buffered']
    #allocation5 [shape = 's32[1]{0}', space=sflag, size = 0x4, scoped, tag = 'scoped memory for double_attention_forward.1']
    #allocation6 [shape = 'u8[16384]{0}', space=vmem, size = 0x4000, scoped, tag = 'output window, operand 2, single buffered']
    %13 = vsyncpa [#allocation3], 0
    %14 = vsyncpa [#allocation5], 0
    // Predicated region
    $region2: #{double_attention_forward.1} parent=1 // pred_check
      _
    $region3: #{double_attention_forward.1} parent=1 // pred_check_branch
      %16 = sbr.rel (0) target = $region5
    $region4: #{double_attention_forward.1} parent=1 // pred_region
      _
    $region5: #{double_attention_forward.1} parent=1 // pred_fallthru
      _
    // Predicated region
    $region6: #{double_attention_forward.1} parent=1 // pred_check
      _
    $region7: #{double_attention_forward.1} parent=1 // pred_check_branch
      %18 = sbr.rel (0) target = $region9
    $region8: #{double_attention_forward.1} parent=1 // pred_region
      _
    $region9: #{double_attention_forward.1} parent=1 // pred_fallthru
      _
    // Predicated region
    $region10: #{double_attention_forward.1} parent=1 // pred_check
      _
    $region11: #{double_attention_forward.1} parent=1 // pred_check_branch
      %20 = sbr.rel (0) target = $region13
    $region12: #{double_attention_forward.1} parent=1 // pred_region
      _
    $region13: #{double_attention_forward.1} parent=1 // pred_fallthru
      _
    // Predicated region
    $region14: #{double_attention_forward.1} parent=1 // pred_check
      _
    $region15: #{double_attention_forward.1} parent=1 // pred_check_branch
      %22 = sbr.rel (0) target = $region17
    $region16: #{double_attention_forward.1} parent=1 // pred_region
      _
    $region17: #{double_attention_forward.1} parent=1 // pred_fallthru
      _
    // Predicated region
    $region18: #{double_attention_forward.1} parent=1 // pred_check
      _
    $region19: #{double_attention_forward.1} parent=1 // pred_check_branch
      %24 = sbr.rel (0) target = $region21
    $region20: #{double_attention_forward.1} parent=1 // pred_region
      _
    $region21: #{double_attention_forward.1} parent=1 // pred_fallthru
      _
    %v25 = vld [vmem:[%s2] sm:$0xff]
    %v26 = vld [vmem:[%s2 + $0x8] sm:$0xff]
    %v27 = vld [vmem:[%s2 + $0x10] sm:$0xff]
    %v28 = vld [vmem:[%s2 + $0x18] sm:$0xff]
    %v29 = vld [vmem:[%s2 + $0x20] sm:$0xff]
    %v30 = vld [vmem:[%s2 + $0x28] sm:$0xff]
    %v31 = vld [vmem:[%s2 + $0x30] sm:$0xff]
    %v32 = vld [vmem:[%s2 + $0x38] sm:$0xff]
    %v33 = vld [vmem:[%s3] sm:$0xff]
    %v34 = vld [vmem:[%s3 + $0x8] sm:$0xff]
    %v35 = vld [vmem:[%s3 + $0x10] sm:$0xff]
    %v36 = vld [vmem:[%s3 + $0x18] sm:$0xff]
    %v37 = vld [vmem:[%s3 + $0x20] sm:$0xff]
    %v38 = vld [vmem:[%s3 + $0x28] sm:$0xff]
    %v39 = vld [vmem:[%s3 + $0x30] sm:$0xff]
    %v40 = vld [vmem:[%s3 + $0x38] sm:$0xff]
    %v41 = vld [vmem:[%s3 + $0x40] sm:$0xff]
    %v42 = vld [vmem:[%s3 + $0x48] sm:$0xff]
    %v43 = vld [vmem:[%s3 + $0x50] sm:$0xff]
    %v44 = vld [vmem:[%s3 + $0x58] sm:$0xff]
    %v45 = vld [vmem:[%s3 + $0x60] sm:$0xff]
    %v46 = vld [vmem:[%s3 + $0x68] sm:$0xff]
    %v47 = vld [vmem:[%s3 + $0x70] sm:$0xff]
    %v48 = vld [vmem:[%s3 + $0x78] sm:$0xff]
    %v49 = vld [vmem:[%s4] sm:$0xff]
    %v50 = vld [vmem:[%s4 + $0x8] sm:$0xff]
    %v51 = vld [vmem:[%s4 + $0x10] sm:$0xff]
    %v52 = vld [vmem:[%s4 + $0x18] sm:$0xff]
    %v53 = vld [vmem:[%s4 + $0x20] sm:$0xff]
    %v54 = vld [vmem:[%s4 + $0x28] sm:$0xff]
    %v55 = vld [vmem:[%s4 + $0x30] sm:$0xff]
    %v56 = vld [vmem:[%s4 + $0x38] sm:$0xff]
    %v57 = vld [vmem:[%s4 + $0x40] sm:$0xff]
    %v58 = vld [vmem:[%s4 + $0x48] sm:$0xff]
    %v59 = vld [vmem:[%s4 + $0x50] sm:$0xff]
    %v60 = vld [vmem:[%s4 + $0x58] sm:$0xff]
    %v61 = vld [vmem:[%s4 + $0x60] sm:$0xff]
    %v62 = vld [vmem:[%s4 + $0x68] sm:$0xff]
    %v63 = vld [vmem:[%s4 + $0x70] sm:$0xff]
    %v64 = vld [vmem:[%s4 + $0x78] sm:$0xff]
    %s65 = scalar_lea.vmem %s4, 128
    %v66 = vld [vmem:[%s65] sm:$0xff]
    %v67 = vld [vmem:[%s65 + $0x8] sm:$0xff]
    %v68 = vld [vmem:[%s65 + $0x10] sm:$0xff]
    %v69 = vld [vmem:[%s65 + $0x18] sm:$0xff]
    %v70 = vld [vmem:[%s65 + $0x20] sm:$0xff]
    %v71 = vld [vmem:[%s65 + $0x28] sm:$0xff]
    %v72 = vld [vmem:[%s65 + $0x30] sm:$0xff]
    %v73 = vld [vmem:[%s65 + $0x38] sm:$0xff]
    %v74 = vld [vmem:[%s65 + $0x40] sm:$0xff]
    %v75 = vld [vmem:[%s65 + $0x48] sm:$0xff]
    %v76 = vld [vmem:[%s65 + $0x50] sm:$0xff]
    %v77 = vld [vmem:[%s65 + $0x58] sm:$0xff]
    %v78 = vld [vmem:[%s65 + $0x60] sm:$0xff]
    %v79 = vld [vmem:[%s65 + $0x68] sm:$0xff]
    %v80 = vld [vmem:[%s65 + $0x70] sm:$0xff]
    %v81 = vld [vmem:[%s65 + $0x78] sm:$0xff]
    %v82 = vld [vmem:[%s0] sm:$0xff]
    %v83 = vld [vmem:[%s1] sm:$0xff]
    %vm84 = vcmask 261120
    %v86 = vsel %vm84, %v82, 0
    %88 = vmatprep.subr.mxu0 %v26
    %89 = vmatpush1.msra.mxu0 %v25
    %90 = vmatprep.subr.mxu0 %v28
    %91 = vmatpush1.msra.mxu0 %v27
    %92 = vmatprep.subr.mxu0 %v30
    %93 = vmatpush1.msra.mxu0 %v29
    %94 = vmatprep.subr.mxu0 %v32
    %95 = vmatpush1.msra.mxu0 %v31
    %96 = vmatprep.subr.mxu0 0.0
    %97 = vmatpush1.msra.mxu0 0.0
    %98 = vmatprep.subr.mxu0 0.0
    %99 = vmatpush1.msra.mxu0 0.0
    %100 = vmatprep.subr.mxu0 0.0
    %101 = vmatpush1.msra.mxu0 0.0
    %102 = vmatprep.subr.mxu0 0.0
    %103 = vmatpush1.msra.mxu0 0.0
    %104 = vmatprep.subr.mxu0 0.0
    %105 = vmatpush1.msra.mxu0 0.0
    %106 = vmatprep.subr.mxu0 0.0
    %107 = vmatpush1.msra.mxu0 0.0
    %108 = vmatprep.subr.mxu0 0.0
    %109 = vmatpush1.msra.mxu0 0.0
    %110 = vmatprep.subr.mxu0 0.0
    %111 = vmatpush1.msra.mxu0 0.0
    %112 = vmatprep.subr.mxu0 0.0
    %113 = vmatpush1.msra.mxu0 0.0
    %114 = vmatprep.subr.mxu0 0.0
    %115 = vmatpush1.msra.mxu0 0.0
    %116 = vmatprep.subr.mxu0 0.0
    %117 = vmatpush1.msra.mxu0 0.0
    %118 = vmatprep.subr.mxu0 0.0
    %119 = vmatpush1.msra.mxu0 0.0
    %120 = vmatprep.subr.mxu0 0.0
    %121 = vmatpush1.msra.mxu0 0.0
    %122 = vmatprep.subr.mxu0 0.0
    %123 = vmatpush1.msra.mxu0 0.0
    %124 = vmatprep.subr.mxu0 0.0
    %125 = vmatpush1.msra.mxu0 0.0
    %126 = vmatprep.subr.mxu0 0.0
    %127 = vmatpush1.msra.mxu0 0.0
    %128 = vmatprep.subr.mxu0 0.0
    %129 = vmatpush1.msra.mxu0 0.0
    %130 = vmatprep.subr.mxu0 0.0
    %131 = vmatpush1.msra.mxu0 0.0
    %132 = vmatprep.subr.mxu0 0.0
    %133 = vmatpush1.msra.mxu0 0.0
    %134 = vmatprep.subr.mxu0 0.0
    %135 = vmatpush1.msra.mxu0 0.0
    %136 = vmatprep.subr.mxu0 0.0
    %137 = vmatpush1.msra.mxu0 0.0
    %138 = vmatprep.subr.mxu0 0.0
    %139 = vmatpush1.msra.mxu0 0.0
    %140 = vmatprep.subr.mxu0 0.0
    %141 = vmatpush1.msra.mxu0 0.0
    %142 = vmatprep.subr.mxu0 0.0
    %143 = vmatpush1.msra.mxu0 0.0
    %144 = vmatprep.subr.mxu0 0.0
    %145 = vmatpush1.msra.mxu0 0.0
    %146 = vmatprep.subr.mxu0 0.0
    %147 = vmatpush1.msra.mxu0 0.0
    %148 = vmatprep.subr.mxu0 0.0
    %149 = vmatpush1.msra.mxu0 0.0
    %150 = vmatprep.subr.mxu0 0.0
    %151 = vmatpush1.msra.mxu0 0.0
    %152 = vmatprep.mubr.f32.mxu0 0.0
    %153 = vmatmul.mubr.f32.gmra.mrb[0].mxu0 %v86
    %v154 = vpop.f32.mrb[0].mxu0
    %v155 = vadd.f32 0.0, %v154
    %v156 = vpop.f32.mrb[0].mxu0
    %v157 = vadd.f32 0.0, %v156
    %158 = vdwg.mxu0
    %v160 = vsel %vm84, %v83, 0
    %162 = vmatprep.subr.mxu0 %v34
    %163 = vmatpush1.msra.mxu0 %v33
    %164 = vmatprep.subr.mxu0 %v38
    %165 = vmatpush1.msra.mxu0 %v37
    %166 = vmatprep.subr.mxu0 %v42
    %167 = vmatpush1.msra.mxu0 %v41
    %168 = vmatprep.subr.mxu0 %v46
    %169 = vmatpush1.msra.mxu0 %v45
    %170 = vmatprep.subr.mxu0 0.0
    %171 = vmatpush1.msra.mxu0 0.0
    %172 = vmatprep.subr.mxu0 0.0
    %173 = vmatpush1.msra.mxu0 0.0
    %174 = vmatprep.subr.mxu0 0.0
    %175 = vmatpush1.msra.mxu0 0.0
    %176 = vmatprep.subr.mxu0 0.0
    %177 = vmatpush1.msra.mxu0 0.0
    %178 = vmatprep.subr.mxu0 0.0
    %179 = vmatpush1.msra.mxu0 0.0
    %180 = vmatprep.subr.mxu0 0.0
    %181 = vmatpush1.msra.mxu0 0.0
    %182 = vmatprep.subr.mxu0 0.0
    %183 = vmatpush1.msra.mxu0 0.0
    %184 = vmatprep.subr.mxu0 0.0
    %185 = vmatpush1.msra.mxu0 0.0
    %186 = vmatprep.subr.mxu0 0.0
    %187 = vmatpush1.msra.mxu0 0.0
    %188 = vmatprep.subr.mxu0 0.0
    %189 = vmatpush1.msra.mxu0 0.0
    %190 = vmatprep.subr.mxu0 0.0
    %191 = vmatpush1.msra.mxu0 0.0
    %192 = vmatprep.subr.mxu0 0.0
    %193 = vmatpush1.msra.mxu0 0.0
    %194 = vmatprep.subr.mxu0 0.0
    %195 = vmatpush1.msra.mxu0 0.0
    %196 = vmatprep.subr.mxu0 0.0
    %197 = vmatpush1.msra.mxu0 0.0
    %198 = vmatprep.subr.mxu0 0.0
    %199 = vmatpush1.msra.mxu0 0.0
    %200 = vmatprep.subr.mxu0 0.0
    %201 = vmatpush1.msra.mxu0 0.0
    %202 = vmatprep.subr.mxu0 0.0
    %203 = vmatpush1.msra.mxu0 0.0
    %204 = vmatprep.subr.mxu0 0.0
    %205 = vmatpush1.msra.mxu0 0.0
    %206 = vmatprep.subr.mxu0 0.0
    %207 = vmatpush1.msra.mxu0 0.0
    %208 = vmatprep.subr.mxu0 0.0
    %209 = vmatpush1.msra.mxu0 0.0
    %210 = vmatprep.subr.mxu0 0.0
    %211 = vmatpush1.msra.mxu0 0.0
    %212 = vmatprep.subr.mxu0 0.0
    %213 = vmatpush1.msra.mxu0 0.0
    %214 = vmatprep.subr.mxu0 0.0
    %215 = vmatpush1.msra.mxu0 0.0
    %216 = vmatprep.subr.mxu0 0.0
    %217 = vmatpush1.msra.mxu0 0.0
    %218 = vmatprep.subr.mxu0 0.0
    %219 = vmatpush1.msra.mxu0 0.0
    %220 = vmatprep.subr.mxu0 0.0
    %221 = vmatpush1.msra.mxu0 0.0
    %222 = vmatprep.subr.mxu0 0.0
    %223 = vmatpush1.msra.mxu0 0.0
    %224 = vmatprep.subr.mxu0 0.0
    %225 = vmatpush1.msra.mxu0 0.0
    %226 = vmatprep.mubr.f32.mxu0 0.0
    %227 = vmatmul.mubr.f32.gmra.mrb[0].mxu0 %v160
    %v228 = vpop.f32.mrb[0].mxu0
    %v229 = vadd.f32 0.0, %v228
    %v230 = vpop.f32.mrb[0].mxu0
    %v231 = vadd.f32 0.0, %v230
    %232 = vdwg.mxu0
    %233 = vmatprep.subr.mxu0 %v36
    %234 = vmatpush1.msra.mxu0 %v35
    %235 = vmatprep.subr.mxu0 %v40
    %236 = vmatpush1.msra.mxu0 %v39
    %237 = vmatprep.subr.mxu0 %v44
    %238 = vmatpush1.msra.mxu0 %v43
    %239 = vmatprep.subr.mxu0 %v48
    %240 = vmatpush1.msra.mxu0 %v47
    %241 = vmatprep.subr.mxu0 0.0
    %242 = vmatpush1.msra.mxu0 0.0
    %243 = vmatprep.subr.mxu0 0.0
    %244 = vmatpush1.msra.mxu0 0.0
    %245 = vmatprep.subr.mxu0 0.0
    %246 = vmatpush1.msra.mxu0 0.0
    %247 = vmatprep.subr.mxu0 0.0
    %248 = vmatpush1.msra.mxu0 0.0
    %249 = vmatprep.subr.mxu0 0.0
    %250 = vmatpush1.msra.mxu0 0.0
    %251 = vmatprep.subr.mxu0 0.0
    %252 = vmatpush1.msra.mxu0 0.0
    %253 = vmatprep.subr.mxu0 0.0
    %254 = vmatpush1.msra.mxu0 0.0
    %255 = vmatprep.subr.mxu0 0.0
    %256 = vmatpush1.msra.mxu0 0.0
    %257 = vmatprep.subr.mxu0 0.0
    %258 = vmatpush1.msra.mxu0 0.0
    %259 = vmatprep.subr.mxu0 0.0
    %260 = vmatpush1.msra.mxu0 0.0
    %261 = vmatprep.subr.mxu0 0.0
    %262 = vmatpush1.msra.mxu0 0.0
    %263 = vmatprep.subr.mxu0 0.0
    %264 = vmatpush1.msra.mxu0 0.0
    %265 = vmatprep.subr.mxu0 0.0
    %266 = vmatpush1.msra.mxu0 0.0
    %267 = vmatprep.subr.mxu0 0.0
    %268 = vmatpush1.msra.mxu0 0.0
    %269 = vmatprep.subr.mxu0 0.0
    %270 = vmatpush1.msra.mxu0 0.0
    %271 = vmatprep.subr.mxu0 0.0
    %272 = vmatpush1.msra.mxu0 0.0
    %273 = vmatprep.subr.mxu0 0.0
    %274 = vmatpush1.msra.mxu0 0.0
    %275 = vmatprep.subr.mxu0 0.0
    %276 = vmatpush1.msra.mxu0 0.0
    %277 = vmatprep.subr.mxu0 0.0
    %278 = vmatpush1.msra.mxu0 0.0
    %279 = vmatprep.subr.mxu0 0.0
    %280 = vmatpush1.msra.mxu0 0.0
    %281 = vmatprep.subr.mxu0 0.0
    %282 = vmatpush1.msra.mxu0 0.0
    %283 = vmatprep.subr.mxu0 0.0
    %284 = vmatpush1.msra.mxu0 0.0
    %285 = vmatprep.subr.mxu0 0.0
    %286 = vmatpush1.msra.mxu0 0.0
    %287 = vmatprep.subr.mxu0 0.0
    %288 = vmatpush1.msra.mxu0 0.0
    %289 = vmatprep.subr.mxu0 0.0
    %290 = vmatpush1.msra.mxu0 0.0
    %291 = vmatprep.subr.mxu0 0.0
    %292 = vmatpush1.msra.mxu0 0.0
    %293 = vmatprep.subr.mxu0 0.0
    %294 = vmatpush1.msra.mxu0 0.0
    %295 = vmatprep.subr.mxu0 0.0
    %296 = vmatpush1.msra.mxu0 0.0
    %297 = vmatprep.mubr.f32.mxu0 0.0
    %298 = vmatmul.mubr.f32.gmra.mrb[0].mxu0 %v160
    %v299 = vpop.f32.mrb[0].mxu0
    %v300 = vadd.f32 0.0, %v299
    %v301 = vpop.f32.mrb[0].mxu0
    %v302 = vadd.f32 0.0, %v301
    %303 = vdwg.mxu0
    %304 = vmatprep.subr.mxu0 0.0
    %305 = vmatpush1.xpose.msra.mxu0 %v229
    %306 = vmatprep.subr.mxu0 0.0
    %307 = vmatpush1.xpose.msra.mxu0 0.0
    %308 = vmatprep.subr.mxu0 0.0
    %309 = vmatpush1.xpose.msra.mxu0 0.0
    %310 = vmatprep.subr.mxu0 0.0
    %311 = vmatpush1.xpose.msra.mxu0 0.0
    %312 = vmatprep.subr.mxu0 0.0
    %313 = vmatpush1.xpose.msra.mxu0 0.0
    %314 = vmatprep.subr.mxu0 0.0
    %315 = vmatpush1.xpose.msra.mxu0 0.0
    %316 = vmatprep.subr.mxu0 0.0
    %317 = vmatpush1.xpose.msra.mxu0 0.0
    %318 = vmatprep.subr.mxu0 0.0
    %319 = vmatpush1.xpose.msra.mxu0 0.0
    %320 = vmatprep.subr.mxu0 0.0
    %321 = vmatpush1.xpose.msra.mxu0 0.0
    %322 = vmatprep.subr.mxu0 0.0
    %323 = vmatpush1.xpose.msra.mxu0 0.0
    %324 = vmatprep.subr.mxu0 0.0
    %325 = vmatpush1.xpose.msra.mxu0 0.0
    %326 = vmatprep.subr.mxu0 0.0
    %327 = vmatpush1.xpose.msra.mxu0 0.0
    %328 = vmatprep.subr.mxu0 0.0
    %329 = vmatpush1.xpose.msra.mxu0 0.0
    %330 = vmatprep.subr.mxu0 0.0
    %331 = vmatpush1.xpose.msra.mxu0 0.0
    %332 = vmatprep.subr.mxu0 0.0
    %333 = vmatpush1.xpose.msra.mxu0 0.0
    %334 = vmatprep.subr.mxu0 0.0
    %335 = vmatpush1.xpose.msra.mxu0 0.0
    %336 = vmatprep.subr.mxu0 0.0
    %337 = vmatpush1.xpose.msra.mxu0 0.0
    %338 = vmatprep.subr.mxu0 0.0
    %339 = vmatpush1.xpose.msra.mxu0 0.0
    %340 = vmatprep.subr.mxu0 0.0
    %341 = vmatpush1.xpose.msra.mxu0 0.0
    %342 = vmatprep.subr.mxu0 0.0
    %343 = vmatpush1.xpose.msra.mxu0 0.0
    %344 = vmatprep.subr.mxu0 0.0
    %345 = vmatpush1.xpose.msra.mxu0 0.0
    %346 = vmatprep.subr.mxu0 0.0
    %347 = vmatpush1.xpose.msra.mxu0 0.0
    %348 = vmatprep.subr.mxu0 0.0
    %349 = vmatpush1.xpose.msra.mxu0 0.0
    %350 = vmatprep.subr.mxu0 0.0
    %351 = vmatpush1.xpose.msra.mxu0 0.0
    %352 = vmatprep.subr.mxu0 0.0
    %353 = vmatpush1.xpose.msra.mxu0 0.0
    %354 = vmatprep.subr.mxu0 0.0
    %355 = vmatpush1.xpose.msra.mxu0 0.0
    %356 = vmatprep.subr.mxu0 0.0
    %357 = vmatpush1.xpose.msra.mxu0 0.0
    %358 = vmatprep.subr.mxu0 0.0
    %359 = vmatpush1.xpose.msra.mxu0 0.0
    %360 = vmatprep.subr.mxu0 0.0
    %361 = vmatpush1.xpose.msra.mxu0 0.0
    %362 = vmatprep.subr.mxu0 0.0
    %363 = vmatpush1.xpose.msra.mxu0 0.0
    %364 = vmatprep.subr.mxu0 0.0
    %365 = vmatpush1.xpose.msra.mxu0 0.0
    %366 = vmatprep.subr.mxu0 0.0
    %367 = vmatpush1.xpose.msra.mxu0 0.0
    %368 = vmatprep.mubr.f32.mxu0 0.0
    %369 = vmatmul.mubr.f32.gmra.mrb[0].mxu0 %v155
    %v370 = vpop.f32.mrb[0].mxu0
    %v371 = vadd.f32 0.0, %v370
    %v372 = vpop.f32.mrb[0].mxu0
    %373 = vdwg.mxu0
    %v374 = vmul.f32 %v371, 0.125
    %vm375 = vcmask 64512
    %v376 = vsel %vm375, %v374, -inf
    %377 = vmax.xlane.f32.xlu0 %v376
    %v378 = vpop.xlane.xlu0 %377
    %v379 = vsub.f32 %v374, %v378
    %v380 = vmul.f32 %v379, 1.442695
    %v381 = vpow.pop %v380
    %v382 = vsel %vm375, %v381, 0.0
    %383 = vadd.xlane.f32.xlu0 %v382
    %v384 = vpop.xlane.xlu0 %383
    %v385 = vrcp.pop %v384
    %v386 = vmul.f32 %v381, %v385
    %387 = vst.msk [vmem:[#allocation4] sm:$0xff] %vm375, %v374
    %388 = vst.msk [vmem:[#allocation6] sm:$0xff] %vm375, %v386
    %v390 = vsel %vm375, %v386, 0
    %392 = vmatprep.subr.mxu0 0.0
    %393 = vmatpush1.msra.mxu0 %v300
    %394 = vmatprep.subr.mxu0 0.0
    %395 = vmatpush1.msra.mxu0 0.0
    %396 = vmatprep.subr.mxu0 0.0
    %397 = vmatpush1.msra.mxu0 0.0
    %398 = vmatprep.subr.mxu0 0.0
    %399 = vmatpush1.msra.mxu0 0.0
    %400 = vmatprep.subr.mxu0 0.0
    %401 = vmatpush1.msra.mxu0 0.0
    %402 = vmatprep.subr.mxu0 0.0
    %403 = vmatpush1.msra.mxu0 0.0
    %404 = vmatprep.subr.mxu0 0.0
    %405 = vmatpush1.msra.mxu0 0.0
    %406 = vmatprep.subr.mxu0 0.0
    %407 = vmatpush1.msra.mxu0 0.0
    %408 = vmatprep.subr.mxu0 0.0
    %409 = vmatpush1.msra.mxu0 0.0
    %410 = vmatprep.subr.mxu0 0.0
    %411 = vmatpush1.msra.mxu0 0.0
    %412 = vmatprep.subr.mxu0 0.0
    %413 = vmatpush1.msra.mxu0 0.0
    %414 = vmatprep.subr.mxu0 0.0
    %415 = vmatpush1.msra.mxu0 0.0
    %416 = vmatprep.subr.mxu0 0.0
    %417 = vmatpush1.msra.mxu0 0.0
    %418 = vmatprep.subr.mxu0 0.0
    %419 = vmatpush1.msra.mxu0 0.0
    %420 = vmatprep.subr.mxu0 0.0
    %421 = vmatpush1.msra.mxu0 0.0
    %422 = vmatprep.subr.mxu0 0.0
    %423 = vmatpush1.msra.mxu0 0.0
    %424 = vmatprep.subr.mxu0 0.0
    %425 = vmatpush1.msra.mxu0 0.0
    %426 = vmatprep.subr.mxu0 0.0
    %427 = vmatpush1.msra.mxu0 0.0
    %428 = vmatprep.subr.mxu0 0.0
    %429 = vmatpush1.msra.mxu0 0.0
    %430 = vmatprep.subr.mxu0 0.0
    %431 = vmatpush1.msra.mxu0 0.0
    %432 = vmatprep.subr.mxu0 0.0
    %433 = vmatpush1.msra.mxu0 0.0
    %434 = vmatprep.subr.mxu0 0.0
    %435 = vmatpush1.msra.mxu0 0.0
    %436 = vmatprep.subr.mxu0 0.0
    %437 = vmatpush1.msra.mxu0 0.0
    %438 = vmatprep.subr.mxu0 0.0
    %439 = vmatpush1.msra.mxu0 0.0
    %440 = vmatprep.subr.mxu0 0.0
    %441 = vmatpush1.msra.mxu0 0.0
    %442 = vmatprep.subr.mxu0 0.0
    %443 = vmatpush1.msra.mxu0 0.0
    %444 = vmatprep.subr.mxu0 0.0
    %445 = vmatpush1.msra.mxu0 0.0
    %446 = vmatprep.subr.mxu0 0.0
    %447 = vmatpush1.msra.mxu0 0.0
    %448 = vmatprep.subr.mxu0 0.0
    %449 = vmatpush1.msra.mxu0 0.0
    %450 = vmatprep.subr.mxu0 0.0
    %451 = vmatpush1.msra.mxu0 0.0
    %452 = vmatprep.subr.mxu0 0.0
    %453 = vmatpush1.msra.mxu0 0.0
    %454 = vmatprep.subr.mxu0 0.0
    %455 = vmatpush1.msra.mxu0 0.0
    %456 = vmatprep.mubr.f32.mxu0 0.0
    %457 = vmatmul.mubr.f32.gmra.mrb[0].mxu0 %v390
    %v458 = vpop.f32.mrb[0].mxu0
    %v459 = vadd.f32 0.0, %v458
    %v460 = vpop.f32.mrb[0].mxu0
    %461 = vdwg.mxu0
    %462 = vmatprep.subr.mxu0 0.0
    %463 = vmatpush1.xpose.msra.mxu0 %v231
    %464 = vmatprep.subr.mxu0 0.0
    %465 = vmatpush1.xpose.msra.mxu0 0.0
    %466 = vmatprep.subr.mxu0 0.0
    %467 = vmatpush1.xpose.msra.mxu0 0.0
    %468 = vmatprep.subr.mxu0 0.0
    %469 = vmatpush1.xpose.msra.mxu0 0.0
    %470 = vmatprep.subr.mxu0 0.0
    %471 = vmatpush1.xpose.msra.mxu0 0.0
    %472 = vmatprep.subr.mxu0 0.0
    %473 = vmatpush1.xpose.msra.mxu0 0.0
    %474 = vmatprep.subr.mxu0 0.0
    %475 = vmatpush1.xpose.msra.mxu0 0.0
    %476 = vmatprep.subr.mxu0 0.0
    %477 = vmatpush1.xpose.msra.mxu0 0.0
    %478 = vmatprep.subr.mxu0 0.0
    %479 = vmatpush1.xpose.msra.mxu0 0.0
    %480 = vmatprep.subr.mxu0 0.0
    %481 = vmatpush1.xpose.msra.mxu0 0.0
    %482 = vmatprep.subr.mxu0 0.0
    %483 = vmatpush1.xpose.msra.mxu0 0.0
    %484 = vmatprep.subr.mxu0 0.0
    %485 = vmatpush1.xpose.msra.mxu0 0.0
    %486 = vmatprep.subr.mxu0 0.0
    %487 = vmatpush1.xpose.msra.mxu0 0.0
    %488 = vmatprep.subr.mxu0 0.0
    %489 = vmatpush1.xpose.msra.mxu0 0.0
    %490 = vmatprep.subr.mxu0 0.0
    %491 = vmatpush1.xpose.msra.mxu0 0.0
    %492 = vmatprep.subr.mxu0 0.0
    %493 = vmatpush1.xpose.msra.mxu0 0.0
    %494 = vmatprep.subr.mxu0 0.0
    %495 = vmatpush1.xpose.msra.mxu0 0.0
    %496 = vmatprep.subr.mxu0 0.0
    %497 = vmatpush1.xpose.msra.mxu0 0.0
    %498 = vmatprep.subr.mxu0 0.0
    %499 = vmatpush1.xpose.msra.mxu0 0.0
    %500 = vmatprep.subr.mxu0 0.0
    %501 = vmatpush1.xpose.msra.mxu0 0.0
    %502 = vmatprep.subr.mxu0 0.0
    %503 = vmatpush1.xpose.msra.mxu0 0.0
    %504 = vmatprep.subr.mxu0 0.0
    %505 = vmatpush1.xpose.msra.mxu0 0.0
    %506 = vmatprep.subr.mxu0 0.0
    %507 = vmatpush1.xpose.msra.mxu0 0.0
    %508 = vmatprep.subr.mxu0 0.0
    %509 = vmatpush1.xpose.msra.mxu0 0.0
    %510 = vmatprep.subr.mxu0 0.0
    %511 = vmatpush1.xpose.msra.mxu0 0.0
    %512 = vmatprep.subr.mxu0 0.0
    %513 = vmatpush1.xpose.msra.mxu0 0.0
    %514 = vmatprep.subr.mxu0 0.0
    %515 = vmatpush1.xpose.msra.mxu0 0.0
    %516 = vmatprep.subr.mxu0 0.0
    %517 = vmatpush1.xpose.msra.mxu0 0.0
    %518 = vmatprep.subr.mxu0 0.0
    %519 = vmatpush1.xpose.msra.mxu0 0.0
    %520 = vmatprep.subr.mxu0 0.0
    %521 = vmatpush1.xpose.msra.mxu0 0.0
    %522 = vmatprep.subr.mxu0 0.0
    %523 = vmatpush1.xpose.msra.mxu0 0.0
    %524 = vmatprep.subr.mxu0 0.0
    %525 = vmatpush1.xpose.msra.mxu0 0.0
    %526 = vmatprep.mubr.f32.mxu0 0.0
    %527 = vmatmul.mubr.f32.gmra.mrb[0].mxu0 %v157
    %v528 = vpop.f32.mrb[0].mxu0
    %v529 = vadd.f32 0.0, %v528
    %v530 = vpop.f32.mrb[0].mxu0
    %531 = vdwg.mxu0
    %v532 = vmul.f32 %v529, 0.125
    %v533 = vsel %vm375, %v532, -inf
    %534 = vmax.xlane.f32.xlu0 %v533
    %v535 = vpop.xlane.xlu0 %534
    %v536 = vsub.f32 %v532, %v535
    %v537 = vmul.f32 %v536, 1.442695
    %v538 = vpow.pop %v537
    %v539 = vsel %vm375, %v538, 0.0
    %540 = vadd.xlane.f32.xlu0 %v539
    %v541 = vpop.xlane.xlu0 %540
    %v542 = vrcp.pop %v541
    %v543 = vmul.f32 %v538, %v542
    %s544 = scalar_lea.vmem [#allocation4], 8
    %545 = vst.msk [vmem:[%s544] sm:$0xff] %vm375, %v532
    %s546 = scalar_lea.vmem [#allocation6], 8
    %547 = vst.msk [vmem:[%s546] sm:$0xff] %vm375, %v543
    %v549 = vsel %vm375, %v543, 0
    %551 = vmatprep.subr.mxu0 0.0
    %552 = vmatpush1.msra.mxu0 %v302
    %553 = vmatprep.subr.mxu0 0.0
    %554 = vmatpush1.msra.mxu0 0.0
    %555 = vmatprep.subr.mxu0 0.0
    %556 = vmatpush1.msra.mxu0 0.0
    %557 = vmatprep.subr.mxu0 0.0
    %558 = vmatpush1.msra.mxu0 0.0
    %559 = vmatprep.subr.mxu0 0.0
    %560 = vmatpush1.msra.mxu0 0.0
    %561 = vmatprep.subr.mxu0 0.0
    %562 = vmatpush1.msra.mxu0 0.0
    %563 = vmatprep.subr.mxu0 0.0
    %564 = vmatpush1.msra.mxu0 0.0
    %565 = vmatprep.subr.mxu0 0.0
    %566 = vmatpush1.msra.mxu0 0.0
    %567 = vmatprep.subr.mxu0 0.0
    %568 = vmatpush1.msra.mxu0 0.0
    %569 = vmatprep.subr.mxu0 0.0
    %570 = vmatpush1.msra.mxu0 0.0
    %571 = vmatprep.subr.mxu0 0.0
    %572 = vmatpush1.msra.mxu0 0.0
    %573 = vmatprep.subr.mxu0 0.0
    %574 = vmatpush1.msra.mxu0 0.0
    %575 = vmatprep.subr.mxu0 0.0
    %576 = vmatpush1.msra.mxu0 0.0
    %577 = vmatprep.subr.mxu0 0.0
    %578 = vmatpush1.msra.mxu0 0.0
    %579 = vmatprep.subr.mxu0 0.0
    %580 = vmatpush1.msra.mxu0 0.0
    %581 = vmatprep.subr.mxu0 0.0
    %582 = vmatpush1.msra.mxu0 0.0
    %583 = vmatprep.subr.mxu0 0.0
    %584 = vmatpush1.msra.mxu0 0.0
    %585 = vmatprep.subr.mxu0 0.0
    %586 = vmatpush1.msra.mxu0 0.0
    %587 = vmatprep.subr.mxu0 0.0
    %588 = vmatpush1.msra.mxu0 0.0
    %589 = vmatprep.subr.mxu0 0.0
    %590 = vmatpush1.msra.mxu0 0.0
    %591 = vmatprep.subr.mxu0 0.0
    %592 = vmatpush1.msra.mxu0 0.0
    %593 = vmatprep.subr.mxu0 0.0
    %594 = vmatpush1.msra.mxu0 0.0
    %595 = vmatprep.subr.mxu0 0.0
    %596 = vmatpush1.msra.mxu0 0.0
    %597 = vmatprep.subr.mxu0 0.0
    %598 = vmatpush1.msra.mxu0 0.0
    %599 = vmatprep.subr.mxu0 0.0
    %600 = vmatpush1.msra.mxu0 0.0
    %601 = vmatprep.subr.mxu0 0.0
    %602 = vmatpush1.msra.mxu0 0.0
    %603 = vmatprep.subr.mxu0 0.0
    %604 = vmatpush1.msra.mxu0 0.0
    %605 = vmatprep.subr.mxu0 0.0
    %606 = vmatpush1.msra.mxu0 0.0
    %607 = vmatprep.subr.mxu0 0.0
    %608 = vmatpush1.msra.mxu0 0.0
    %609 = vmatprep.subr.mxu0 0.0
    %610 = vmatpush1.msra.mxu0 0.0
    %611 = vmatprep.subr.mxu0 0.0
    %612 = vmatpush1.msra.mxu0 0.0
    %613 = vmatprep.subr.mxu0 0.0
    %614 = vmatpush1.msra.mxu0 0.0
    %615 = vmatprep.mubr.f32.mxu0 0.0
    %616 = vmatmul.mubr.f32.gmra.mrb[0].mxu0 %v549
    %v617 = vpop.f32.mrb[0].mxu0
    %v618 = vadd.f32 0.0, %v617
    %v619 = vpop.f32.mrb[0].mxu0
    %620 = vdwg.mxu0
    %621 = vmatprep.subr.mxu0 0.0
    %622 = vmatpush1.msra.mxu0 %v66
    %623 = vmatprep.subr.mxu0 0.0
    %624 = vmatpush1.msra.mxu0 %v67
    %625 = vmatprep.subr.mxu0 0.0
    %626 = vmatpush1.msra.mxu0 %v68
    %627 = vmatprep.subr.mxu0 0.0
    %628 = vmatpush1.msra.mxu0 %v69
    %629 = vmatprep.subr.mxu0 0.0
    %630 = vmatpush1.msra.mxu0 %v70
    %631 = vmatprep.subr.mxu0 0.0
    %632 = vmatpush1.msra.mxu0 %v71
    %633 = vmatprep.subr.mxu0 0.0
    %634 = vmatpush1.msra.mxu0 %v72
    %635 = vmatprep.subr.mxu0 0.0
    %636 = vmatpush1.msra.mxu0 %v73
    %637 = vmatprep.subr.mxu0 0.0
    %638 = vmatpush1.msra.mxu0 %v74
    %639 = vmatprep.subr.mxu0 0.0
    %640 = vmatpush1.msra.mxu0 %v75
    %641 = vmatprep.subr.mxu0 0.0
    %642 = vmatpush1.msra.mxu0 %v76
    %643 = vmatprep.subr.mxu0 0.0
    %644 = vmatpush1.msra.mxu0 %v77
    %645 = vmatprep.subr.mxu0 0.0
    %646 = vmatpush1.msra.mxu0 %v78
    %647 = vmatprep.subr.mxu0 0.0
    %648 = vmatpush1.msra.mxu0 %v79
    %649 = vmatprep.subr.mxu0 0.0
    %650 = vmatpush1.msra.mxu0 %v80
    %651 = vmatprep.subr.mxu0 0.0
    %652 = vmatpush1.msra.mxu0 %v81
    %653 = vmatprep.subr.mxu0 0.0
    %654 = vmatpush1.msra.mxu0 0.0
    %655 = vmatprep.subr.mxu0 0.0
    %656 = vmatpush1.msra.mxu0 0.0
    %657 = vmatprep.subr.mxu0 0.0
    %658 = vmatpush1.msra.mxu0 0.0
    %659 = vmatprep.subr.mxu0 0.0
    %660 = vmatpush1.msra.mxu0 0.0
    %661 = vmatprep.subr.mxu0 0.0
    %662 = vmatpush1.msra.mxu0 0.0
    %663 = vmatprep.subr.mxu0 0.0
    %664 = vmatpush1.msra.mxu0 0.0
    %665 = vmatprep.subr.mxu0 0.0
    %666 = vmatpush1.msra.mxu0 0.0
    %667 = vmatprep.subr.mxu0 0.0
    %668 = vmatpush1.msra.mxu0 0.0
    %669 = vmatprep.subr.mxu0 0.0
    %670 = vmatpush1.msra.mxu0 0.0
    %671 = vmatprep.subr.mxu0 0.0
    %672 = vmatpush1.msra.mxu0 0.0
    %673 = vmatprep.subr.mxu0 0.0
    %674 = vmatpush1.msra.mxu0 0.0
    %675 = vmatprep.subr.mxu0 0.0
    %676 = vmatpush1.msra.mxu0 0.0
    %677 = vmatprep.subr.mxu0 0.0
    %678 = vmatpush1.msra.mxu0 0.0
    %679 = vmatprep.subr.mxu0 0.0
    %680 = vmatpush1.msra.mxu0 0.0
    %681 = vmatprep.subr.mxu0 0.0
    %682 = vmatpush1.msra.mxu0 0.0
    %683 = vmatprep.subr.mxu0 0.0
    %684 = vmatpush1.msra.mxu0 0.0
    %685 = vmatprep.mubr.f32.mxu0 0.0
    %686 = vmatmul.mubr.f32.gmra.mrb[0].mxu0 %v618
    %v687 = vpop.f32.mrb[0].mxu0
    %v688 = vadd.f32 0.0, %v687
    %v689 = vpop.f32.mrb[0].mxu0
    %690 = vdwg.mxu0
    %691 = vmatprep.subr.mxu0 0.0
    %692 = vmatpush1.msra.mxu0 %v49
    %693 = vmatprep.subr.mxu0 0.0
    %694 = vmatpush1.msra.mxu0 %v50
    %695 = vmatprep.subr.mxu0 0.0
    %696 = vmatpush1.msra.mxu0 %v51
    %697 = vmatprep.subr.mxu0 0.0
    %698 = vmatpush1.msra.mxu0 %v52
    %699 = vmatprep.subr.mxu0 0.0
    %700 = vmatpush1.msra.mxu0 %v53
    %701 = vmatprep.subr.mxu0 0.0
    %702 = vmatpush1.msra.mxu0 %v54
    %703 = vmatprep.subr.mxu0 0.0
    %704 = vmatpush1.msra.mxu0 %v55
    %705 = vmatprep.subr.mxu0 0.0
    %706 = vmatpush1.msra.mxu0 %v56
    %707 = vmatprep.subr.mxu0 0.0
    %708 = vmatpush1.msra.mxu0 %v57
    %709 = vmatprep.subr.mxu0 0.0
    %710 = vmatpush1.msra.mxu0 %v58
    %711 = vmatprep.subr.mxu0 0.0
    %712 = vmatpush1.msra.mxu0 %v59
    %713 = vmatprep.subr.mxu0 0.0
    %714 = vmatpush1.msra.mxu0 %v60
    %715 = vmatprep.subr.mxu0 0.0
    %716 = vmatpush1.msra.mxu0 %v61
    %717 = vmatprep.subr.mxu0 0.0
    %718 = vmatpush1.msra.mxu0 %v62
    %719 = vmatprep.subr.mxu0 0.0
    %720 = vmatpush1.msra.mxu0 %v63
    %721 = vmatprep.subr.mxu0 0.0
    %722 = vmatpush1.msra.mxu0 %v64
    %723 = vmatprep.subr.mxu0 0.0
    %724 = vmatpush1.msra.mxu0 0.0
    %725 = vmatprep.subr.mxu0 0.0
    %726 = vmatpush1.msra.mxu0 0.0
    %727 = vmatprep.subr.mxu0 0.0
    %728 = vmatpush1.msra.mxu0 0.0
    %729 = vmatprep.subr.mxu0 0.0
    %730 = vmatpush1.msra.mxu0 0.0
    %731 = vmatprep.subr.mxu0 0.0
    %732 = vmatpush1.msra.mxu0 0.0
    %733 = vmatprep.subr.mxu0 0.0
    %734 = vmatpush1.msra.mxu0 0.0
    %735 = vmatprep.subr.mxu0 0.0
    %736 = vmatpush1.msra.mxu0 0.0
    %737 = vmatprep.subr.mxu0 0.0
    %738 = vmatpush1.msra.mxu0 0.0
    %739 = vmatprep.subr.mxu0 0.0
    %740 = vmatpush1.msra.mxu0 0.0
    %741 = vmatprep.subr.mxu0 0.0
    %742 = vmatpush1.msra.mxu0 0.0
    %743 = vmatprep.subr.mxu0 0.0
    %744 = vmatpush1.msra.mxu0 0.0
    %745 = vmatprep.subr.mxu0 0.0
    %746 = vmatpush1.msra.mxu0 0.0
    %747 = vmatprep.subr.mxu0 0.0
    %748 = vmatpush1.msra.mxu0 0.0
    %749 = vmatprep.subr.mxu0 0.0
    %750 = vmatpush1.msra.mxu0 0.0
    %751 = vmatprep.subr.mxu0 0.0
    %752 = vmatpush1.msra.mxu0 0.0
    %753 = vmatprep.subr.mxu0 0.0
    %754 = vmatpush1.msra.mxu0 0.0
    %755 = vmatprep.mubr.f32.mxu0 0.0
    %756 = vmatmul.mubr.f32.gmra.mrb[0].mxu0 %v459
    %v757 = vpop.f32.mrb[0].mxu0
    %v758 = vadd.f32 %v688, %v757
    %v759 = vpop.f32.mrb[0].mxu0
    %760 = vdwg.mxu0
    %761 = vst.msk [vmem:[#allocation2] sm:$0xff] %vm84, %v758
    %s762 = scalar_lea.vmem %s0, 8
    %v763 = vld [vmem:[%s762] sm:$0xff]
    %s764 = scalar_lea.vmem %s1, 8
    %v765 = vld [vmem:[%s764] sm:$0xff]
    %v767 = vsel %vm84, %v763, 0
    %769 = vmatprep.subr.mxu0 %v26
    %770 = vmatpush1.msra.mxu0 %v25
    %771 = vmatprep.subr.mxu0 %v28
    %772 = vmatpush1.msra.mxu0 %v27
    %773 = vmatprep.subr.mxu0 %v30
    %774 = vmatpush1.msra.mxu0 %v29
    %775 = vmatprep.subr.mxu0 %v32
    %776 = vmatpush1.msra.mxu0 %v31
    %777 = vmatprep.subr.mxu0 0.0
    %778 = vmatpush1.msra.mxu0 0.0
    %779 = vmatprep.subr.mxu0 0.0
    %780 = vmatpush1.msra.mxu0 0.0
    %781 = vmatprep.subr.mxu0 0.0
    %782 = vmatpush1.msra.mxu0 0.0
    %783 = vmatprep.subr.mxu0 0.0
    %784 = vmatpush1.msra.mxu0 0.0
    %785 = vmatprep.subr.mxu0 0.0
    %786 = vmatpush1.msra.mxu0 0.0
    %787 = vmatprep.subr.mxu0 0.0
    %788 = vmatpush1.msra.mxu0 0.0
    %789 = vmatprep.subr.mxu0 0.0
    %790 = vmatpush1.msra.mxu0 0.0
    %791 = vmatprep.subr.mxu0 0.0
    %792 = vmatpush1.msra.mxu0 0.0
    %793 = vmatprep.subr.mxu0 0.0
    %794 = vmatpush1.msra.mxu0 0.0
    %795 = vmatprep.subr.mxu0 0.0
    %796 = vmatpush1.msra.mxu0 0.0
    %797 = vmatprep.subr.mxu0 0.0
    %798 = vmatpush1.msra.mxu0 0.0
    %799 = vmatprep.subr.mxu0 0.0
    %800 = vmatpush1.msra.mxu0 0.0
    %801 = vmatprep.subr.mxu0 0.0
    %802 = vmatpush1.msra.mxu0 0.0
    %803 = vmatprep.subr.mxu0 0.0
    %804 = vmatpush1.msra.mxu0 0.0
    %805 = vmatprep.subr.mxu0 0.0
    %806 = vmatpush1.msra.mxu0 0.0
    %807 = vmatprep.subr.mxu0 0.0
    %808 = vmatpush1.msra.mxu0 0.0
    %809 = vmatprep.subr.mxu0 0.0
    %810 = vmatpush1.msra.mxu0 0.0
    %811 = vmatprep.subr.mxu0 0.0
    %812 = vmatpush1.msra.mxu0 0.0
    %813 = vmatprep.subr.mxu0 0.0
    %814 = vmatpush1.msra.mxu0 0.0
    %815 = vmatprep.subr.mxu0 0.0
    %816 = vmatpush1.msra.mxu0 0.0
    %817 = vmatprep.subr.mxu0 0.0
    %818 = vmatpush1.msra.mxu0 0.0
    %819 = vmatprep.subr.mxu0 0.0
    %820 = vmatpush1.msra.mxu0 0.0
    %821 = vmatprep.subr.mxu0 0.0
    %822 = vmatpush1.msra.mxu0 0.0
    %823 = vmatprep.subr.mxu0 0.0
    %824 = vmatpush1.msra.mxu0 0.0
    %825 = vmatprep.subr.mxu0 0.0
    %826 = vmatpush1.msra.mxu0 0.0
    %827 = vmatprep.subr.mxu0 0.0
    %828 = vmatpush1.msra.mxu0 0.0
    %829 = vmatprep.subr.mxu0 0.0
    %830 = vmatpush1.msra.mxu0 0.0
    %831 = vmatprep.subr.mxu0 0.0
    %832 = vmatpush1.msra.mxu0 0.0
    %833 = vmatprep.mubr.f32.mxu0 0.0
    %834 = vmatmul.mubr.f32.gmra.mrb[0].mxu0 %v767
    %v835 = vpop.f32.mrb[0].mxu0
    %v836 = vadd.f32 0.0, %v835
    %v837 = vpop.f32.mrb[0].mxu0
    %v838 = vadd.f32 0.0, %v837
    %839 = vdwg.mxu0
    %v841 = vsel %vm84, %v765, 0
    %843 = vmatprep.subr.mxu0 %v34
    %844 = vmatpush1.msra.mxu0 %v33
    %845 = vmatprep.subr.mxu0 %v38
    %846 = vmatpush1.msra.mxu0 %v37
    %847 = vmatprep.subr.mxu0 %v42
    %848 = vmatpush1.msra.mxu0 %v41
    %849 = vmatprep.subr.mxu0 %v46
    %850 = vmatpush1.msra.mxu0 %v45
    %851 = vmatprep.subr.mxu0 0.0
    %852 = vmatpush1.msra.mxu0 0.0
    %853 = vmatprep.subr.mxu0 0.0
    %854 = vmatpush1.msra.mxu0 0.0
    %855 = vmatprep.subr.mxu0 0.0
    %856 = vmatpush1.msra.mxu0 0.0
    %857 = vmatprep.subr.mxu0 0.0
    %858 = vmatpush1.msra.mxu0 0.0
    %859 = vmatprep.subr.mxu0 0.0
    %860 = vmatpush1.msra.mxu0 0.0
    %861 = vmatprep.subr.mxu0 0.0
    %862 = vmatpush1.msra.mxu0 0.0
    %863 = vmatprep.subr.mxu0 0.0
    %864 = vmatpush1.msra.mxu0 0.0
    %865 = vmatprep.subr.mxu0 0.0
    %866 = vmatpush1.msra.mxu0 0.0
    %867 = vmatprep.subr.mxu0 0.0
    %868 = vmatpush1.msra.mxu0 0.0
    %869 = vmatprep.subr.mxu0 0.0
    %870 = vmatpush1.msra.mxu0 0.0
    %871 = vmatprep.subr.mxu0 0.0
    %872 = vmatpush1.msra.mxu0 0.0
    %873 = vmatprep.subr.mxu0 0.0
    %874 = vmatpush1.msra.mxu0 0.0
    %875 = vmatprep.subr.mxu0 0.0
    %876 = vmatpush1.msra.mxu0 0.0
    %877 = vmatprep.subr.mxu0 0.0
    %878 = vmatpush1.msra.mxu0 0.0
    %879 = vmatprep.subr.mxu0 0.0
    %880 = vmatpush1.msra.mxu0 0.0
    %881 = vmatprep.subr.mxu0 0.0
    %882 = vmatpush1.msra.mxu0 0.0
    %883 = vmatprep.subr.mxu0 0.0
    %884 = vmatpush1.msra.mxu0 0.0
    %885 = vmatprep.subr.mxu0 0.0
    %886 = vmatpush1.msra.mxu0 0.0
    %887 = vmatprep.subr.mxu0 0.0
    %888 = vmatpush1.msra.mxu0 0.0
    %889 = vmatprep.subr.mxu0 0.0
    %890 = vmatpush1.msra.mxu0 0.0
    %891 = vmatprep.subr.mxu0 0.0
    %892 = vmatpush1.msra.mxu0 0.0
    %893 = vmatprep.subr.mxu0 0.0
    %894 = vmatpush1.msra.mxu0 0.0
    %895 = vmatprep.subr.mxu0 0.0
    %896 = vmatpush1.msra.mxu0 0.0
    %897 = vmatprep.subr.mxu0 0.0
    %898 = vmatpush1.msra.mxu0 0.0
    %899 = vmatprep.subr.mxu0 0.0
    %900 = vmatpush1.msra.mxu0 0.0
    %901 = vmatprep.subr.mxu0 0.0
    %902 = vmatpush1.msra.mxu0 0.0
    %903 = vmatprep.subr.mxu0 0.0
    %904 = vmatpush1.msra.mxu0 0.0
    %905 = vmatprep.subr.mxu0 0.0
    %906 = vmatpush1.msra.mxu0 0.0
    %907 = vmatprep.mubr.f32.mxu0 0.0
    %908 = vmatmul.mubr.f32.gmra.mrb[0].mxu0 %v841
    %v909 = vpop.f32.mrb[0].mxu0
    %v910 = vadd.f32 0.0, %v909
    %v911 = vpop.f32.mrb[0].mxu0
    %v912 = vadd.f32 0.0, %v911
    %913 = vdwg.mxu0
    %914 = vmatprep.subr.mxu0 %v36
    %915 = vmatpush1.msra.mxu0 %v35
    %916 = vmatprep.subr.mxu0 %v40
    %917 = vmatpush1.msra.mxu0 %v39
    %918 = vmatprep.subr.mxu0 %v44
    %919 = vmatpush1.msra.mxu0 %v43
    %920 = vmatprep.subr.mxu0 %v48
    %921 = vmatpush1.msra.mxu0 %v47
    %922 = vmatprep.subr.mxu0 0.0
    %923 = vmatpush1.msra.mxu0 0.0
    %924 = vmatprep.subr.mxu0 0.0
    %925 = vmatpush1.msra.mxu0 0.0
    %926 = vmatprep.subr.mxu0 0.0
    %927 = vmatpush1.msra.mxu0 0.0
    %928 = vmatprep.subr.mxu0 0.0
    %929 = vmatpush1.msra.mxu0 0.0
    %930 = vmatprep.subr.mxu0 0.0
    %931 = vmatpush1.msra.mxu0 0.0
    %932 = vmatprep.subr.mxu0 0.0
    %933 = vmatpush1.msra.mxu0 0.0
    %934 = vmatprep.subr.mxu0 0.0
    %935 = vmatpush1.msra.mxu0 0.0
    %936 = vmatprep.subr.mxu0 0.0
    %937 = vmatpush1.msra.mxu0 0.0
    %938 = vmatprep.subr.mxu0 0.0
    %939 = vmatpush1.msra.mxu0 0.0
    %940 = vmatprep.subr.mxu0 0.0
    %941 = vmatpush1.msra.mxu0 0.0
    %942 = vmatprep.subr.mxu0 0.0
    %943 = vmatpush1.msra.mxu0 0.0
    %944 = vmatprep.subr.mxu0 0.0
    %945 = vmatpush1.msra.mxu0 0.0
    %946 = vmatprep.subr.mxu0 0.0
    %947 = vmatpush1.msra.mxu0 0.0
    %948 = vmatprep.subr.mxu0 0.0
    %949 = vmatpush1.msra.mxu0 0.0
    %950 = vmatprep.subr.mxu0 0.0
    %951 = vmatpush1.msra.mxu0 0.0
    %952 = vmatprep.subr.mxu0 0.0
    %953 = vmatpush1.msra.mxu0 0.0
    %954 = vmatprep.subr.mxu0 0.0
    %955 = vmatpush1.msra.mxu0 0.0
    %956 = vmatprep.subr.mxu0 0.0
    %957 = vmatpush1.msra.mxu0 0.0
    %958 = vmatprep.subr.mxu0 0.0
    %959 = vmatpush1.msra.mxu0 0.0
    %960 = vmatprep.subr.mxu0 0.0
    %961 = vmatpush1.msra.mxu0 0.0
    %962 = vmatprep.subr.mxu0 0.0
    %963 = vmatpush1.msra.mxu0 0.0
    %964 = vmatprep.subr.mxu0 0.0
    %965 = vmatpush1.msra.mxu0 0.0
    %966 = vmatprep.subr.mxu0 0.0
    %967 = vmatpush1.msra.mxu0 0.0
    %968 = vmatprep.subr.mxu0 0.0
    %969 = vmatpush1.msra.mxu0 0.0
    %970 = vmatprep.subr.mxu0 0.0
    %971 = vmatpush1.msra.mxu0 0.0
    %972 = vmatprep.subr.mxu0 0.0
    %973 = vmatpush1.msra.mxu0 0.0
    %974 = vmatprep.subr.mxu0 0.0
    %975 = vmatpush1.msra.mxu0 0.0
    %976 = vmatprep.subr.mxu0 0.0
    %977 = vmatpush1.msra.mxu0 0.0
    %978 = vmatprep.mubr.f32.mxu0 0.0
    %979 = vmatmul.mubr.f32.gmra.mrb[0].mxu0 %v841
    %v980 = vpop.f32.mrb[0].mxu0
    %v981 = vadd.f32 0.0, %v980
    %v982 = vpop.f32.mrb[0].mxu0
    %v983 = vadd.f32 0.0, %v982
    %984 = vdwg.mxu0
    %985 = vmatprep.subr.mxu0 0.0
    %986 = vmatpush1.xpose.msra.mxu0 %v910
    %987 = vmatprep.subr.mxu0 0.0
    %988 = vmatpush1.xpose.msra.mxu0 0.0
    %989 = vmatprep.subr.mxu0 0.0
    %990 = vmatpush1.xpose.msra.mxu0 0.0
    %991 = vmatprep.subr.mxu0 0.0
    %992 = vmatpush1.xpose.msra.mxu0 0.0
    %993 = vmatprep.subr.mxu0 0.0
    %994 = vmatpush1.xpose.msra.mxu0 0.0
    %995 = vmatprep.subr.mxu0 0.0
    %996 = vmatpush1.xpose.msra.mxu0 0.0
    %997 = vmatprep.subr.mxu0 0.0
    %998 = vmatpush1.xpose.msra.mxu0 0.0
    %999 = vmatprep.subr.mxu0 0.0
    %1000 = vmatpush1.xpose.msra.mxu0 0.0
    %1001 = vmatprep.subr.mxu0 0.0
    %1002 = vmatpush1.xpose.msra.mxu0 0.0
    %1003 = vmatprep.subr.mxu0 0.0
    %1004 = vmatpush1.xpose.msra.mxu0 0.0
    %1005 = vmatprep.subr.mxu0 0.0
    %1006 = vmatpush1.xpose.msra.mxu0 0.0
    %1007 = vmatprep.subr.mxu0 0.0
    %1008 = vmatpush1.xpose.msra.mxu0 0.0
    %1009 = vmatprep.subr.mxu0 0.0
    %1010 = vmatpush1.xpose.msra.mxu0 0.0
    %1011 = vmatprep.subr.mxu0 0.0
    %1012 = vmatpush1.xpose.msra.mxu0 0.0
    %1013 = vmatprep.subr.mxu0 0.0
    %1014 = vmatpush1.xpose.msra.mxu0 0.0
    %1015 = vmatprep.subr.mxu0 0.0
    %1016 = vmatpush1.xpose.msra.mxu0 0.0
    %1017 = vmatprep.subr.mxu0 0.0
    %1018 = vmatpush1.xpose.msra.mxu0 0.0
    %1019 = vmatprep.subr.mxu0 0.0
    %1020 = vmatpush1.xpose.msra.mxu0 0.0
    %1021 = vmatprep.subr.mxu0 0.0
    %1022 = vmatpush1.xpose.msra.mxu0 0.0
    %1023 = vmatprep.subr.mxu0 0.0
    %1024 = vmatpush1.xpose.msra.mxu0 0.0
    %1025 = vmatprep.subr.mxu0 0.0
    %1026 = vmatpush1.xpose.msra.mxu0 0.0
    %1027 = vmatprep.subr.mxu0 0.0
    %1028 = vmatpush1.xpose.msra.mxu0 0.0
    %1029 = vmatprep.subr.mxu0 0.0
    %1030 = vmatpush1.xpose.msra.mxu0 0.0
    %1031 = vmatprep.subr.mxu0 0.0
    %1032 = vmatpush1.xpose.msra.mxu0 0.0
    %1033 = vmatprep.subr.mxu0 0.0
    %1034 = vmatpush1.xpose.msra.mxu0 0.0
    %1035 = vmatprep.subr.mxu0 0.0
    %1036 = vmatpush1.xpose.msra.mxu0 0.0
    %1037 = vmatprep.subr.mxu0 0.0
    %1038 = vmatpush1.xpose.msra.mxu0 0.0
    %1039 = vmatprep.subr.mxu0 0.0
    %1040 = vmatpush1.xpose.msra.mxu0 0.0
    %1041 = vmatprep.subr.mxu0 0.0
    %1042 = vmatpush1.xpose.msra.mxu0 0.0
    %1043 = vmatprep.subr.mxu0 0.0
    %1044 = vmatpush1.xpose.msra.mxu0 0.0
    %1045 = vmatprep.subr.mxu0 0.0
    %1046 = vmatpush1.xpose.msra.mxu0 0.0
    %1047 = vmatprep.subr.mxu0 0.0
    %1048 = vmatpush1.xpose.msra.mxu0 0.0
    %1049 = vmatprep.mubr.f32.mxu0 0.0
    %1050 = vmatmul.mubr.f32.gmra.mrb[0].mxu0 %v836
    %v1051 = vpop.f32.mrb[0].mxu0
    %v1052 = vadd.f32 0.0, %v1051
    %v1053 = vpop.f32.mrb[0].mxu0
    %1054 = vdwg.mxu0
    %v1055 = vmul.f32 %v1052, 0.125
    %v1056 = vsel %vm375, %v1055, -inf
    %1057 = vmax.xlane.f32.xlu0 %v1056
    %v1058 = vpop.xlane.xlu0 %1057
    %v1059 = vsub.f32 %v1055, %v1058
    %v1060 = vmul.f32 %v1059, 1.442695
    %v1061 = vpow.pop %v1060
    %v1062 = vsel %vm375, %v1061, 0.0
    %1063 = vadd.xlane.f32.xlu0 %v1062
    %v1064 = vpop.xlane.xlu0 %1063
    %v1065 = vrcp.pop %v1064
    %v1066 = vmul.f32 %v1061, %v1065
    %s1067 = scalar_lea.vmem [#allocation4], 16
    %1068 = vst.msk [vmem:[%s1067] sm:$0xff] %vm375, %v1055
    %s1069 = scalar_lea.vmem [#allocation6], 16
    %1070 = vst.msk [vmem:[%s1069] sm:$0xff] %vm375, %v1066
    %v1072 = vsel %vm375, %v1066, 0
    %1074 = vmatprep.subr.mxu0 0.0
    %1075 = vmatpush1.msra.mxu0 %v981
    %1076 = vmatprep.subr.mxu0 0.0
    %1077 = vmatpush1.msra.mxu0 0.0
    %1078 = vmatprep.subr.mxu0 0.0
    %1079 = vmatpush1.msra.mxu0 0.0
    %1080 = vmatprep.subr.mxu0 0.0
    %1081 = vmatpush1.msra.mxu0 0.0
    %1082 = vmatprep.subr.mxu0 0.0
    %1083 = vmatpush1.msra.mxu0 0.0
    %1084 = vmatprep.subr.mxu0 0.0
    %1085 = vmatpush1.msra.mxu0 0.0
    %1086 = vmatprep.subr.mxu0 0.0
    %1087 = vmatpush1.msra.mxu0 0.0
    %1088 = vmatprep.subr.mxu0 0.0
    %1089 = vmatpush1.msra.mxu0 0.0
    %1090 = vmatprep.subr.mxu0 0.0
    %1091 = vmatpush1.msra.mxu0 0.0
    %1092 = vmatprep.subr.mxu0 0.0
    %1093 = vmatpush1.msra.mxu0 0.0
    %1094 = vmatprep.subr.mxu0 0.0
    %1095 = vmatpush1.msra.mxu0 0.0
    %1096 = vmatprep.subr.mxu0 0.0
    %1097 = vmatpush1.msra.mxu0 0.0
    %1098 = vmatprep.subr.mxu0 0.0
    %1099 = vmatpush1.msra.mxu0 0.0
    %1100 = vmatprep.subr.mxu0 0.0
    %1101 = vmatpush1.msra.mxu0 0.0
    %1102 = vmatprep.subr.mxu0 0.0
    %1103 = vmatpush1.msra.mxu0 0.0
    %1104 = vmatprep.subr.mxu0 0.0
    %1105 = vmatpush1.msra.mxu0 0.0
    %1106 = vmatprep.subr.mxu0 0.0
    %1107 = vmatpush1.msra.mxu0 0.0
    %1108 = vmatprep.subr.mxu0 0.0
    %1109 = vmatpush1.msra.mxu0 0.0
    %1110 = vmatprep.subr.mxu0 0.0
    %1111 = vmatpush1.msra.mxu0 0.0
    %1112 = vmatprep.subr.mxu0 0.0
    %1113 = vmatpush1.msra.mxu0 0.0
    %1114 = vmatprep.subr.mxu0 0.0
    %1115 = vmatpush1.msra.mxu0 0.0
    %1116 = vmatprep.subr.mxu0 0.0
    %1117 = vmatpush1.msra.mxu0 0.0
    %1118 = vmatprep.subr.mxu0 0.0
    %1119 = vmatpush1.msra.mxu0 0.0
    %1120 = vmatprep.subr.mxu0 0.0
    %1121 = vmatpush1.msra.mxu0 0.0
    %1122 = vmatprep.subr.mxu0 0.0
    %1123 = vmatpush1.msra.mxu0 0.0
    %1124 = vmatprep.subr.mxu0 0.0
    %1125 = vmatpush1.msra.mxu0 0.0
    %1126 = vmatprep.subr.mxu0 0.0
    %1127 = vmatpush1.msra.mxu0 0.0
    %1128 = vmatprep.subr.mxu0 0.0
    %1129 = vmatpush1.msra.mxu0 0.0
    %1130 = vmatprep.subr.mxu0 0.0
    %1131 = vmatpush1.msra.mxu0 0.0
    %1132 = vmatprep.subr.mxu0 0.0
    %1133 = vmatpush1.msra.mxu0 0.0
    %1134 = vmatprep.subr.mxu0 0.0
    %1135 = vmatpush1.msra.mxu0 0.0
    %1136 = vmatprep.subr.mxu0 0.0
    %1137 = vmatpush1.msra.mxu0 0.0
    %1138 = vmatprep.mubr.f32.mxu0 0.0
    %1139 = vmatmul.mubr.f32.gmra.mrb[0].mxu0 %v1072
    %v1140 = vpop.f32.mrb[0].mxu0
    %v1141 = vadd.f32 0.0, %v1140
    %v1142 = vpop.f32.mrb[0].mxu0
    %1143 = vdwg.mxu0
    %1144 = vmatprep.subr.mxu0 0.0
    %1145 = vmatpush1.xpose.msra.mxu0 %v912
    %1146 = vmatprep.subr.mxu0 0.0
    %1147 = vmatpush1.xpose.msra.mxu0 0.0
    %1148 = vmatprep.subr.mxu0 0.0
    %1149 = vmatpush1.xpose.msra.mxu0 0.0
    %1150 = vmatprep.subr.mxu0 0.0
    %1151 = vmatpush1.xpose.msra.mxu0 0.0
    %1152 = vmatprep.subr.mxu0 0.0
    %1153 = vmatpush1.xpose.msra.mxu0 0.0
    %1154 = vmatprep.subr.mxu0 0.0
    %1155 = vmatpush1.xpose.msra.mxu0 0.0
    %1156 = vmatprep.subr.mxu0 0.0
    %1157 = vmatpush1.xpose.msra.mxu0 0.0
    %1158 = vmatprep.subr.mxu0 0.0
    %1159 = vmatpush1.xpose.msra.mxu0 0.0
    %1160 = vmatprep.subr.mxu0 0.0
    %1161 = vmatpush1.xpose.msra.mxu0 0.0
    %1162 = vmatprep.subr.mxu0 0.0
    %1163 = vmatpush1.xpose.msra.mxu0 0.0
    %1164 = vmatprep.subr.mxu0 0.0
    %1165 = vmatpush1.xpose.msra.mxu0 0.0
    %1166 = vmatprep.subr.mxu0 0.0
    %1167 = vmatpush1.xpose.msra.mxu0 0.0
    %1168 = vmatprep.subr.mxu0 0.0
    %1169 = vmatpush1.xpose.msra.mxu0 0.0
    %1170 = vmatprep.subr.mxu0 0.0
    %1171 = vmatpush1.xpose.msra.mxu0 0.0
    %1172 = vmatprep.subr.mxu0 0.0
    %1173 = vmatpush1.xpose.msra.mxu0 0.0
    %1174 = vmatprep.subr.mxu0 0.0
    %1175 = vmatpush1.xpose.msra.mxu0 0.0
    %1176 = vmatprep.subr.mxu0 0.0
    %1177 = vmatpush1.xpose.msra.mxu0 0.0
    %1178 = vmatprep.subr.mxu0 0.0
    %1179 = vmatpush1.xpose.msra.mxu0 0.0
    %1180 = vmatprep.subr.mxu0 0.0
    %1181 = vmatpush1.xpose.msra.mxu0 0.0
    %1182 = vmatprep.subr.mxu0 0.0
    %1183 = vmatpush1.xpose.msra.mxu0 0.0
    %1184 = vmatprep.subr.mxu0 0.0
    %1185 = vmatpush1.xpose.msra.mxu0 0.0
    %1186 = vmatprep.subr.mxu0 0.0
    %1187 = vmatpush1.xpose.msra.mxu0 0.0
    %1188 = vmatprep.subr.mxu0 0.0
    %1189 = vmatpush1.xpose.msra.mxu0 0.0
    %1190 = vmatprep.subr.mxu0 0.0
    %1191 = vmatpush1.xpose.msra.mxu0 0.0
    %1192 = vmatprep.subr.mxu0 0.0
    %1193 = vmatpush1.xpose.msra.mxu0 0.0
    %1194 = vmatprep.subr.mxu0 0.0
    %1195 = vmatpush1.xpose.msra.mxu0 0.0
    %1196 = vmatprep.subr.mxu0 0.0
    %1197 = vmatpush1.xpose.msra.mxu0 0.0
    %1198 = vmatprep.subr.mxu0 0.0
    %1199 = vmatpush1.xpose.msra.mxu0 0.0
    %1200 = vmatprep.subr.mxu0 0.0
    %1201 = vmatpush1.xpose.msra.mxu0 0.0
    %1202 = vmatprep.subr.mxu0 0.0
    %1203 = vmatpush1.xpose.msra.mxu0 0.0
    %1204 = vmatprep.subr.mxu0 0.0
    %1205 = vmatpush1.xpose.msra.mxu0 0.0
    %1206 = vmatprep.subr.mxu0 0.0
    %1207 = vmatpush1.xpose.msra.mxu0 0.0
    %1208 = vmatprep.mubr.f32.mxu0 0.0
    %1209 = vmatmul.mubr.f32.gmra.mrb[0].mxu0 %v838
    %v1210 = vpop.f32.mrb[0].mxu0
    %v1211 = vadd.f32 0.0, %v1210
    %v1212 = vpop.f32.mrb[0].mxu0
    %1213 = vdwg.mxu0
    %v1214 = vmul.f32 %v1211, 0.125
    %v1215 = vsel %vm375, %v1214, -inf
    %1216 = vmax.xlane.f32.xlu0 %v1215
    %v1217 = vpop.xlane.xlu0 %1216
    %v1218 = vsub.f32 %v1214, %v1217
    %v1219 = vmul.f32 %v1218, 1.442695
    %v1220 = vpow.pop %v1219
    %v1221 = vsel %vm375, %v1220, 0.0
    %1222 = vadd.xlane.f32.xlu0 %v1221
    %v1223 = vpop.xlane.xlu0 %1222
    %v1224 = vrcp.pop %v1223
    %v1225 = vmul.f32 %v1220, %v1224
    %s1226 = scalar_lea.vmem [#allocation4], 24
    %1227 = vst.msk [vmem:[%s1226] sm:$0xff] %vm375, %v1214
    %s1228 = scalar_lea.vmem [#allocation6], 24
    %1229 = vst.msk [vmem:[%s1228] sm:$0xff] %vm375, %v1225
    %v1231 = vsel %vm375, %v1225, 0
    %1233 = vmatprep.subr.mxu0 0.0
    %1234 = vmatpush1.msra.mxu0 %v983
    %1235 = vmatprep.subr.mxu0 0.0
    %1236 = vmatpush1.msra.mxu0 0.0
    %1237 = vmatprep.subr.mxu0 0.0
    %1238 = vmatpush1.msra.mxu0 0.0
    %1239 = vmatprep.subr.mxu0 0.0
    %1240 = vmatpush1.msra.mxu0 0.0
    %1241 = vmatprep.subr.mxu0 0.0
    %1242 = vmatpush1.msra.mxu0 0.0
    %1243 = vmatprep.subr.mxu0 0.0
    %1244 = vmatpush1.msra.mxu0 0.0
    %1245 = vmatprep.subr.mxu0 0.0
    %1246 = vmatpush1.msra.mxu0 0.0
    %1247 = vmatprep.subr.mxu0 0.0
    %1248 = vmatpush1.msra.mxu0 0.0
    %1249 = vmatprep.subr.mxu0 0.0
    %1250 = vmatpush1.msra.mxu0 0.0
    %1251 = vmatprep.subr.mxu0 0.0
    %1252 = vmatpush1.msra.mxu0 0.0
    %1253 = vmatprep.subr.mxu0 0.0
    %1254 = vmatpush1.msra.mxu0 0.0
    %1255 = vmatprep.subr.mxu0 0.0
    %1256 = vmatpush1.msra.mxu0 0.0
    %1257 = vmatprep.subr.mxu0 0.0
    %1258 = vmatpush1.msra.mxu0 0.0
    %1259 = vmatprep.subr.mxu0 0.0
    %1260 = vmatpush1.msra.mxu0 0.0
    %1261 = vmatprep.subr.mxu0 0.0
    %1262 = vmatpush1.msra.mxu0 0.0
    %1263 = vmatprep.subr.mxu0 0.0
    %1264 = vmatpush1.msra.mxu0 0.0
    %1265 = vmatprep.subr.mxu0 0.0
    %1266 = vmatpush1.msra.mxu0 0.0
    %1267 = vmatprep.subr.mxu0 0.0
    %1268 = vmatpush1.msra.mxu0 0.0
    %1269 = vmatprep.subr.mxu0 0.0
    %1270 = vmatpush1.msra.mxu0 0.0
    %1271 = vmatprep.subr.mxu0 0.0
    %1272 = vmatpush1.msra.mxu0 0.0
    %1273 = vmatprep.subr.mxu0 0.0
    %1274 = vmatpush1.msra.mxu0 0.0
    %1275 = vmatprep.subr.mxu0 0.0
    %1276 = vmatpush1.msra.mxu0 0.0
    %1277 = vmatprep.subr.mxu0 0.0
    %1278 = vmatpush1.msra.mxu0 0.0
    %1279 = vmatprep.subr.mxu0 0.0
    %1280 = vmatpush1.msra.mxu0 0.0
    %1281 = vmatprep.subr.mxu0 0.0
    %1282 = vmatpush1.msra.mxu0 0.0
    %1283 = vmatprep.subr.mxu0 0.0
    %1284 = vmatpush1.msra.mxu0 0.0
    %1285 = vmatprep.subr.mxu0 0.0
    %1286 = vmatpush1.msra.mxu0 0.0
    %1287 = vmatprep.subr.mxu0 0.0
    %1288 = vmatpush1.msra.mxu0 0.0
    %1289 = vmatprep.subr.mxu0 0.0
    %1290 = vmatpush1.msra.mxu0 0.0
    %1291 = vmatprep.subr.mxu0 0.0
    %1292 = vmatpush1.msra.mxu0 0.0
    %1293 = vmatprep.subr.mxu0 0.0
    %1294 = vmatpush1.msra.mxu0 0.0
    %1295 = vmatprep.subr.mxu0 0.0
    %1296 = vmatpush1.msra.mxu0 0.0
    %1297 = vmatprep.mubr.f32.mxu0 0.0
    %1298 = vmatmul.mubr.f32.gmra.mrb[0].mxu0 %v1231
    %v1299 = vpop.f32.mrb[0].mxu0
    %v1300 = vadd.f32 0.0, %v1299
    %v1301 = vpop.f32.mrb[0].mxu0
    %1302 = vdwg.mxu0
    %1303 = vmatprep.subr.mxu0 0.0
    %1304 = vmatpush1.msra.mxu0 %v66
    %1305 = vmatprep.subr.mxu0 0.0
    %1306 = vmatpush1.msra.mxu0 %v67
    %1307 = vmatprep.subr.mxu0 0.0
    %1308 = vmatpush1.msra.mxu0 %v68
    %1309 = vmatprep.subr.mxu0 0.0
    %1310 = vmatpush1.msra.mxu0 %v69
    %1311 = vmatprep.subr.mxu0 0.0
    %1312 = vmatpush1.msra.mxu0 %v70
    %1313 = vmatprep.subr.mxu0 0.0
    %1314 = vmatpush1.msra.mxu0 %v71
    %1315 = vmatprep.subr.mxu0 0.0
    %1316 = vmatpush1.msra.mxu0 %v72
    %1317 = vmatprep.subr.mxu0 0.0
    %1318 = vmatpush1.msra.mxu0 %v73
    %1319 = vmatprep.subr.mxu0 0.0
    %1320 = vmatpush1.msra.mxu0 %v74
    %1321 = vmatprep.subr.mxu0 0.0
    %1322 = vmatpush1.msra.mxu0 %v75
    %1323 = vmatprep.subr.mxu0 0.0
    %1324 = vmatpush1.msra.mxu0 %v76
    %1325 = vmatprep.subr.mxu0 0.0
    %1326 = vmatpush1.msra.mxu0 %v77
    %1327 = vmatprep.subr.mxu0 0.0
    %1328 = vmatpush1.msra.mxu0 %v78
    %1329 = vmatprep.subr.mxu0 0.0
    %1330 = vmatpush1.msra.mxu0 %v79
    %1331 = vmatprep.subr.mxu0 0.0
    %1332 = vmatpush1.msra.mxu0 %v80
    %1333 = vmatprep.subr.mxu0 0.0
    %1334 = vmatpush1.msra.mxu0 %v81
    %1335 = vmatprep.subr.mxu0 0.0
    %1336 = vmatpush1.msra.mxu0 0.0
    %1337 = vmatprep.subr.mxu0 0.0
    %1338 = vmatpush1.msra.mxu0 0.0
    %1339 = vmatprep.subr.mxu0 0.0
    %1340 = vmatpush1.msra.mxu0 0.0
    %1341 = vmatprep.subr.mxu0 0.0
    %1342 = vmatpush1.msra.mxu0 0.0
    %1343 = vmatprep.subr.mxu0 0.0
    %1344 = vmatpush1.msra.mxu0 0.0
    %1345 = vmatprep.subr.mxu0 0.0
    %1346 = vmatpush1.msra.mxu0 0.0
    %1347 = vmatprep.subr.mxu0 0.0
    %1348 = vmatpush1.msra.mxu0 0.0
    %1349 = vmatprep.subr.mxu0 0.0
    %1350 = vmatpush1.msra.mxu0 0.0
    %1351 = vmatprep.subr.mxu0 0.0
    %1352 = vmatpush1.msra.mxu0 0.0
    %1353 = vmatprep.subr.mxu0 0.0
    %1354 = vmatpush1.msra.mxu0 0.0
    %1355 = vmatprep.subr.mxu0 0.0
    %1356 = vmatpush1.msra.mxu0 0.0
    %1357 = vmatprep.subr.mxu0 0.0
    %1358 = vmatpush1.msra.mxu0 0.0
    %1359 = vmatprep.subr.mxu0 0.0
    %1360 = vmatpush1.msra.mxu0 0.0
    %1361 = vmatprep.subr.mxu0 0.0
    %1362 = vmatpush1.msra.mxu0 0.0
    %1363 = vmatprep.subr.mxu0 0.0
    %1364 = vmatpush1.msra.mxu0 0.0
    %1365 = vmatprep.subr.mxu0 0.0
    %1366 = vmatpush1.msra.mxu0 0.0
    %1367 = vmatprep.mubr.f32.mxu0 0.0
    %1368 = vmatmul.mubr.f32.gmra.mrb[0].mxu0 %v1300
    %v1369 = vpop.f32.mrb[0].mxu0
    %v1370 = vadd.f32 0.0, %v1369
    %v1371 = vpop.f32.mrb[0].mxu0
    %1372 = vdwg.mxu0
    %1373 = vmatprep.subr.mxu0 0.0
    %1374 = vmatpush1.msra.mxu0 %v49
    %1375 = vmatprep.subr.mxu0 0.0
    %1376 = vmatpush1.msra.mxu0 %v50
    %1377 = vmatprep.subr.mxu0 0.0
    %1378 = vmatpush1.msra.mxu0 %v51
    %1379 = vmatprep.subr.mxu0 0.0
    %1380 = vmatpush1.msra.mxu0 %v52
    %1381 = vmatprep.subr.mxu0 0.0
    %1382 = vmatpush1.msra.mxu0 %v53
    %1383 = vmatprep.subr.mxu0 0.0
    %1384 = vmatpush1.msra.mxu0 %v54
    %1385 = vmatprep.subr.mxu0 0.0
    %1386 = vmatpush1.msra.mxu0 %v55
    %1387 = vmatprep.subr.mxu0 0.0
    %1388 = vmatpush1.msra.mxu0 %v56
    %1389 = vmatprep.subr.mxu0 0.0
    %1390 = vmatpush1.msra.mxu0 %v57
    %1391 = vmatprep.subr.mxu0 0.0
    %1392 = vmatpush1.msra.mxu0 %v58
    %1393 = vmatprep.subr.mxu0 0.0
    %1394 = vmatpush1.msra.mxu0 %v59
    %1395 = vmatprep.subr.mxu0 0.0
    %1396 = vmatpush1.msra.mxu0 %v60
    %1397 = vmatprep.subr.mxu0 0.0
    %1398 = vmatpush1.msra.mxu0 %v61
    %1399 = vmatprep.subr.mxu0 0.0
    %1400 = vmatpush1.msra.mxu0 %v62
    %1401 = vmatprep.subr.mxu0 0.0
    %1402 = vmatpush1.msra.mxu0 %v63
    %1403 = vmatprep.subr.mxu0 0.0
    %1404 = vmatpush1.msra.mxu0 %v64
    %1405 = vmatprep.subr.mxu0 0.0
    %1406 = vmatpush1.msra.mxu0 0.0
    %1407 = vmatprep.subr.mxu0 0.0
    %1408 = vmatpush1.msra.mxu0 0.0
    %1409 = vmatprep.subr.mxu0 0.0
    %1410 = vmatpush1.msra.mxu0 0.0
    %1411 = vmatprep.subr.mxu0 0.0
    %1412 = vmatpush1.msra.mxu0 0.0
    %1413 = vmatprep.subr.mxu0 0.0
    %1414 = vmatpush1.msra.mxu0 0.0
    %1415 = vmatprep.subr.mxu0 0.0
    %1416 = vmatpush1.msra.mxu0 0.0
    %1417 = vmatprep.subr.mxu0 0.0
    %1418 = vmatpush1.msra.mxu0 0.0
    %1419 = vmatprep.subr.mxu0 0.0
    %1420 = vmatpush1.msra.mxu0 0.0
    %1421 = vmatprep.subr.mxu0 0.0
    %1422 = vmatpush1.msra.mxu0 0.0
    %1423 = vmatprep.subr.mxu0 0.0
    %1424 = vmatpush1.msra.mxu0 0.0
    %1425 = vmatprep.subr.mxu0 0.0
    %1426 = vmatpush1.msra.mxu0 0.0
    %1427 = vmatprep.subr.mxu0 0.0
    %1428 = vmatpush1.msra.mxu0 0.0
    %1429 = vmatprep.subr.mxu0 0.0
    %1430 = vmatpush1.msra.mxu0 0.0
    %1431 = vmatprep.subr.mxu0 0.0
    %1432 = vmatpush1.msra.mxu0 0.0
    %1433 = vmatprep.subr.mxu0 0.0
    %1434 = vmatpush1.msra.mxu0 0.0
    %1435 = vmatprep.subr.mxu0 0.0
    %1436 = vmatpush1.msra.mxu0 0.0
    %1437 = vmatprep.mubr.f32.mxu0 0.0
    %1438 = vmatmul.mubr.f32.gmra.mrb[0].mxu0 %v1141
    %v1439 = vpop.f32.mrb[0].mxu0
    %v1440 = vadd.f32 %v1370, %v1439
    %v1441 = vpop.f32.mrb[0].mxu0
    %1442 = vdwg.mxu0
    %s1443 = scalar_lea.vmem [#allocation2], 8
    %1444 = vst.msk [vmem:[%s1443] sm:$0xff] %vm84, %v1440
    // Predicated region
    $region22: #{double_attention_forward.1} parent=1 // pred_check
      _
    $region23: #{double_attention_forward.1} parent=1 // pred_check_branch
      %1446 = sbr.rel (0) target = $region25
    $region24: #{double_attention_forward.1} parent=1 // pred_region
      %s1448 = ssub.s32 256, 256
      %1449 = vsyncadd [#allocation3], %s1448
      %s1450 = sshll.u32 [#allocation2], 4
      %s1451 = int_to_ptr.vmem [resolvable:$true] %s1450
      %1456 = dma.vmem_to_hbm [thread:$0]  %s1451, 256, %s5, [#allocation3], 128, 128, 8
    $region25: #{double_attention_forward.1} parent=1 // pred_fallthru
      _
    // Predicated region
    $region26: #{double_attention_forward.1} parent=1 // pred_check
      _
    $region27: #{double_attention_forward.1} parent=1 // pred_check_branch
      %1458 = sbr.rel (0) target = $region29
    $region28: #{double_attention_forward.1} parent=1 // pred_region
      %s1460 = ssub.s32 512, 512
      %1461 = vsyncadd [#allocation5], %s1460
      %s1462 = sshll.u32 [#allocation4], 4
      %s1463 = int_to_ptr.vmem [resolvable:$true] %s1462
      %1468 = dma.vmem_to_hbm [thread:$0]  %s1463, 512, %s6, [#allocation5], 128, 128, 8
    $region29: #{double_attention_forward.1} parent=1 // pred_fallthru
      _
    // Predicated region
    $region30: #{double_attention_forward.1} parent=1 // pred_check
      _
    $region31: #{double_attention_forward.1} parent=1 // pred_check_branch
      %1470 = sbr.rel (0) target = $region33
    $region32: #{double_attention_forward.1} parent=1 // pred_region
      %s1472 = ssub.s32 512, 512
      %1473 = vsyncadd [#allocation5], %s1472
      %s1474 = sshll.u32 [#allocation6], 4
      %s1475 = int_to_ptr.vmem [resolvable:$true] %s1474
      %1480 = dma.vmem_to_hbm [thread:$0]  %s1475, 512, %s7, [#allocation5], 128, 128, 8
    $region33: #{double_attention_forward.1} parent=1 // pred_fallthru
      _
    // Predicated region
    $region34: #{double_attention_forward.1} parent=1 // pred_check
      _
    $region35: #{double_attention_forward.1} parent=1 // pred_check_branch
      %1482 = sbr.rel (0) target = $region37
    $region36: #{double_attention_forward.1} parent=1 // pred_region
      %1483 = dma.done [#allocation3], 256
    $region37: #{double_attention_forward.1} parent=1 // pred_fallthru
      _
    // Predicated region
    $region38: #{double_attention_forward.1} parent=1 // pred_check
      _
    $region39: #{double_attention_forward.1} parent=1 // pred_check_branch
      %1485 = sbr.rel (0) target = $region41
    $region40: #{double_attention_forward.1} parent=1 // pred_region
      %1486 = dma.done [#allocation5], 512
    $region41: #{double_attention_forward.1} parent=1 // pred_fallthru
      _
    // Predicated region
    $region42: #{double_attention_forward.1} parent=1 // pred_check
      _
    $region43: #{double_attention_forward.1} parent=1 // pred_check_branch
      %1488 = sbr.rel (0) target = $region45
    $region44: #{double_attention_forward.1} parent=1 // pred_region
      %1489 = dma.done [#allocation5], 512
    $region45: #{double_attention_forward.1} parent=1 // pred_fallthru
      _
    %1490 = vsyncpa [#allocation3], 1
    %1491 = vsyncpa [#allocation5], 1

</llo_original>
